<compile_context>
chip_gen: v5e
topology: v5e:2x2
jax: 0.10.0
libtpu: 0.0.40
codegen_flags: <defaults>
</compile_context>

<pallas_src>
import jax
import jax.numpy as jnp
from jax.experimental import pallas as pl
from jax.experimental.pallas import tpu as pltpu


def fcgen_kernel(x_ref, w1_ref, b1_ref, w2_ref, b2_ref, o_ref):
    # x: [TB, Z] bf16, w1: [Z, H] bf16, b1: [1, H] f32,
    # w2: [H, Dp] bf16, b2: [1, Dp] f32, o: [TB, Dp] f32
    h = jnp.dot(x_ref[...], w1_ref[...],
                preferred_element_type=jnp.float32)          # [TB, H] f32 (MXU)
    h = h + b1_ref[...]                                      # bias (VPU, f32)
    h = jnp.maximum(h, 0.01 * h)                             # LeakyReLU(0.01)
    y = jnp.dot(h.astype(jnp.bfloat16), w2_ref[...],
                preferred_element_type=jnp.float32)          # [TB, Dp] f32 (MXU)
    y = y + b2_ref[...]                                      # bias (VPU, f32)
    o_ref[...] = jnp.tanh(y).astype(o_ref.dtype)             # Tanh (EUP, f32)


def fcgen_forward(x, w1, b1, w2, b2, *, tb=128):
    """x: [B, z_dim] float32 -> [B, img_dim] float32."""
    B, Z = x.shape
    H = w1.shape[1]
    D = w2.shape[1]

    nb = pl.cdiv(B, tb)
    Bp = nb * tb                          # batch padded to tile multiple
    Dp = pl.cdiv(D, 128) * 128            # lane-dense output feature dim

    # Pad batch rows and output-feature columns; sliced off after the call.
    x_p = x if Bp == B else jnp.pad(x, ((0, Bp - B), (0, 0)))
    w2_p = w2 if Dp == D else jnp.pad(w2, ((0, 0), (0, Dp - D)))
    b2_p = b2 if Dp == D else jnp.pad(b2, (0, Dp - D))

    # bf16 MXU inputs; biases / accumulation / activations stay f32.
    x_bf = x_p.astype(jnp.bfloat16)
    w1_bf = w1.astype(jnp.bfloat16)
    w2_bf = w2_p.astype(jnp.bfloat16)
    b1_2d = b1.reshape(1, H).astype(jnp.float32)
    b2_2d = b2_p.reshape(1, Dp).astype(jnp.float32)

    out = pl.pallas_call(
        fcgen_kernel,
        out_shape=jax.ShapeDtypeStruct((Bp, Dp), jnp.float32),
        grid_spec=pl.GridSpec(
            grid=(nb,),
            in_specs=[
                pl.BlockSpec((tb, Z), lambda i: (i, 0)),   # x tile (pipelined)
                pl.BlockSpec((Z, H), lambda i: (0, 0)),    # w1 resident
                pl.BlockSpec((1, H), lambda i: (0, 0)),    # b1 resident
                pl.BlockSpec((H, Dp), lambda i: (0, 0)),   # w2 resident
                pl.BlockSpec((1, Dp), lambda i: (0, 0)),   # b2 resident
            ],
            out_specs=pl.BlockSpec((tb, Dp), lambda i: (i, 0)),
        ),
        compiler_params=pltpu.CompilerParams(
            dimension_semantics=("parallel",),      # megacore on v7x
            vmem_limit_bytes=32 * 1024 * 1024,      # safe on v7x's 64 MiB VMEM
        ),
    )(x_bf, w1_bf, b1_2d, w2_bf, b2_2d)

    return out[:B, :D]


def init_params(key, z_dim, img_dim):
    """Deterministic init matching PyTorch nn.Linear default (uniform +-1/sqrt(fan_in))."""
    k1, k2, k3, k4 = jax.random.split(key, 4)
    hidden = 256
    lim1 = 1.0 / jnp.sqrt(jnp.float32(z_dim))
    lim2 = 1.0 / jnp.sqrt(jnp.float32(hidden))
    # stored as [in, out]
    w1 = jax.random.uniform(k1, (z_dim, hidden), jnp.float32, -lim1, lim1)
    b1 = jax.random.uniform(k2, (hidden,), jnp.float32, -lim1, lim1)
    w2 = jax.random.uniform(k3, (hidden, img_dim), jnp.float32, -lim2, lim2)
    b2 = jax.random.uniform(k4, (img_dim,), jnp.float32, -lim2, lim2)
    return w1, b1, w2, b2


if __name__ == "__main__":
    key = jax.random.PRNGKey(0)
    k_x, k_p = jax.random.split(key)

    # MNIST-like generator shapes: exercises batch tiling (2 grid steps with
    # tb=128) and lane-padding of img_dim (784 -> 896 inside the kernel).
    batch = 256
    z_dim = 64
    img_dim = 784

    x = jax.random.normal(k_x, (batch, z_dim), jnp.float32)
    w1, b1, w2, b2 = init_params(k_p, z_dim, img_dim)

    out = fcgen_forward(x, w1, b1, w2, b2, tb=128)
    out = jax.block_until_ready(out)

    # Pure-JAX reference with the same bf16 matmul inputs / f32 accumulation.
    h_ref = jnp.dot(x.astype(jnp.bfloat16), w1.astype(jnp.bfloat16),
                    preferred_element_type=jnp.float32) + b1
    h_ref = jnp.maximum(h_ref, 0.01 * h_ref)
    y_ref = jnp.tanh(jnp.dot(h_ref.astype(jnp.bfloat16), w2.astype(jnp.bfloat16),
                             preferred_element_type=jnp.float32) + b2)

    assert out.shape == (batch, img_dim)
    assert jnp.allclose(out, y_ref, atol=1e-2, rtol=1e-2), \
        float(jnp.max(jnp.abs(out - y_ref)))

    print("KERNEL_OK")
</pallas_src>

<mosaic_0001>
module attributes {stable_mosaic.version = 11 : i64} {
  func.func @fcgen_kernel(%arg0: i32, %arg1: memref<128x64xbf16, #tpu.memory_space<vmem>>, %arg2: memref<64x256xbf16, #tpu.memory_space<vmem>>, %arg3: memref<1x256xf32, #tpu.memory_space<vmem>>, %arg4: memref<256x896xbf16, #tpu.memory_space<vmem>>, %arg5: memref<1x896xf32, #tpu.memory_space<vmem>>, %arg6: memref<128x896xf32, #tpu.memory_space<vmem>>) attributes {dimension_semantics = [#tpu.dimension_semantics<parallel>], iteration_bounds = array<i64: 2>, scalar_prefetch = 0 : i64, scratch_operands = 0 : i64, tpu.core_type = #tpu.core_type<tc>, window_params = [{transform_indices = @transform_0, window_bounds = array<i64: 128, 64>}, {pipeline_mode = #tpu.pipeline_mode<synchronous>, transform_indices = @transform_1, window_bounds = array<i64: 64, 256>}, {pipeline_mode = #tpu.pipeline_mode<synchronous>, transform_indices = @transform_2, window_bounds = array<i64: 1, 256>}, {pipeline_mode = #tpu.pipeline_mode<synchronous>, transform_indices = @transform_3, window_bounds = array<i64: 256, 896>}, {pipeline_mode = #tpu.pipeline_mode<synchronous>, transform_indices = @transform_4, window_bounds = array<i64: 1, 896>}, {transform_indices = @transform_5, window_bounds = array<i64: 128, 896>}]} {
    %c0 = arith.constant 0 : index
    %c0_0 = arith.constant 0 : index
    %0 = vector.load %arg1[%c0, %c0_0] : memref<128x64xbf16, #tpu.memory_space<vmem>>, vector<128x64xbf16>
    %c0_1 = arith.constant 0 : index
    %c0_2 = arith.constant 0 : index
    %1 = vector.load %arg2[%c0_1, %c0_2] : memref<64x256xbf16, #tpu.memory_space<vmem>>, vector<64x256xbf16>
    %cst = arith.constant dense<0.000000e+00> : vector<128x256xf32>
    %2 = tpu.matmul %0, %1, %cst {dimension_numbers = #tpu.dot_dimension_numbers<[1], [0], [0], [1], [0, 0, 1, 1], [], []>} : vector<128x64xbf16>, vector<64x256xbf16>, vector<128x256xf32> -> vector<128x256xf32>
    %c0_3 = arith.constant 0 : index
    %c0_4 = arith.constant 0 : index
    %3 = vector.load %arg3[%c0_3, %c0_4] : memref<1x256xf32, #tpu.memory_space<vmem>>, vector<1x256xf32>
    %4 = vector.broadcast %3 : vector<1x256xf32> to vector<128x256xf32>
    %5 = arith.addf %2, %4 : vector<128x256xf32>
    %cst_5 = arith.constant 0.00999999977 : f32
    %6 = vector.broadcast %cst_5 : f32 to vector<128x256xf32>
    %7 = arith.mulf %6, %5 : vector<128x256xf32>
    %8 = arith.maximumf %5, %7 : vector<128x256xf32>
    %9 = arith.truncf %8 : vector<128x256xf32> to vector<128x256xbf16>
    %c0_6 = arith.constant 0 : index
    %c0_7 = arith.constant 0 : index
    %10 = vector.load %arg4[%c0_6, %c0_7] : memref<256x896xbf16, #tpu.memory_space<vmem>>, vector<256x896xbf16>
    %cst_8 = arith.constant dense<0.000000e+00> : vector<128x896xf32>
    %11 = tpu.matmul %9, %10, %cst_8 {dimension_numbers = #tpu.dot_dimension_numbers<[1], [0], [0], [1], [0, 0, 1, 1], [], []>} : vector<128x256xbf16>, vector<256x896xbf16>, vector<128x896xf32> -> vector<128x896xf32>
    %c0_9 = arith.constant 0 : index
    %c0_10 = arith.constant 0 : index
    %12 = vector.load %arg5[%c0_9, %c0_10] : memref<1x896xf32, #tpu.memory_space<vmem>>, vector<1x896xf32>
    %13 = vector.broadcast %12 : vector<1x896xf32> to vector<128x896xf32>
    %14 = arith.addf %11, %13 : vector<128x896xf32>
    %15 = math.tanh %14 : vector<128x896xf32>
    %c0_11 = arith.constant 0 : index
    %c0_12 = arith.constant 0 : index
    %16 = vector.load %arg6[%c0_11, %c0_12] : memref<128x896xf32, #tpu.memory_space<vmem>>, vector<128x896xf32>
    tpu.vector_store %arg6[%c0_11, %c0_12], %15 {strides = array<i32>} : memref<128x896xf32, #tpu.memory_space<vmem>>, vector<128x896xf32>,
    return
  }
  func.func @transform_0(%arg0: i32) -> (i32, i32) {
    %c0_i32 = arith.constant 0 : i32
    %c0_i32_0 = arith.constant 0 : i32
    return %arg0, %c0_i32 : i32, i32
  }
  func.func @transform_1(%arg0: i32) -> (i32, i32) {
    %c0_i32 = arith.constant 0 : i32
    %c0_i32_0 = arith.constant 0 : i32
    %c0_i32_1 = arith.constant 0 : i32
    return %c0_i32, %c0_i32_0 : i32, i32
  }
  func.func @transform_2(%arg0: i32) -> (i32, i32) {
    %c0_i32 = arith.constant 0 : i32
    %c0_i32_0 = arith.constant 0 : i32
    %c0_i32_1 = arith.constant 0 : i32
    return %c0_i32, %c0_i32_0 : i32, i32
  }
  func.func @transform_3(%arg0: i32) -> (i32, i32) {
    %c0_i32 = arith.constant 0 : i32
    %c0_i32_0 = arith.constant 0 : i32
    %c0_i32_1 = arith.constant 0 : i32
    return %c0_i32, %c0_i32_0 : i32, i32
  }
  func.func @transform_4(%arg0: i32) -> (i32, i32) {
    %c0_i32 = arith.constant 0 : i32
    %c0_i32_0 = arith.constant 0 : i32
    %c0_i32_1 = arith.constant 0 : i32
    return %c0_i32, %c0_i32_0 : i32, i32
  }
  func.func @transform_5(%arg0: i32) -> (i32, i32) {
    %c0_i32 = arith.constant 0 : i32
    %c0_i32_0 = arith.constant 0 : i32
    return %arg0, %c0_i32 : i32, i32
  }
}

</mosaic_0001>

<llo_original>
// kernel: tpu_custom_call.1
$region0: #{tpu_custom_call.1}
  #allocation0 [shape = 'u32[]', space=smem, size = 0x4, offset = 0x4, fixed_abs, tag = 'smem constant byte address 0x4 - core index']
  #allocation1 [shape = 'u32[72,128]{1,0:T(1,128)}', space=vmem, size = 0x9000, scoped, tag = 'internal scratch']
  %s0 = inlined_call_operand.vmem [shape: bf16[256,64], index: 0, kind: input, shape index: {}]
  %s1 = inlined_call_operand.vmem [shape: bf16[64,256], index: 1, kind: input, shape index: {}]
  %s2 = inlined_call_operand.vmem [shape: f32[1,256], index: 2, kind: input, shape index: {}]
  %s3 = inlined_call_operand.hbm [shape: bf16[256,896], index: 3, kind: input, shape index: {}]
  %s4 = inlined_call_operand.vmem [shape: f32[1,896], index: 4, kind: input, shape index: {}]
  %s5 = inlined_call_operand.hbm [shape: f32[256,896], index: 5, kind: output, shape index: {}]
  %s6 = sld [smem:[#allocation0]]
  $region57: #{tpu_custom_call.1} parent=0
    _
  %s8 = ssub.s32 1, %s6
  %s9 = scalar_select 0, %s8, %s6
  $region1: #{tpu_custom_call.1} parent=0
    #allocation2 [shape = 'u8[458752]{0}', space=vmem, size = 0x70000, scoped, tag = 'input window, operand 3, single buffered']
    #allocation3 [shape = 's32[2]{0}', space=sflag, size = 0x8, scoped, tag = 'scoped memory for tpu_custom_call.1']
    #allocation4 [shape = 's32[2]{0}', space=sflag, size = 0x8, scoped, tag = 'scoped memory for tpu_custom_call.1']
    #allocation5 [shape = 'u8[917504]{0}', space=vmem, size = 0xe0000, scoped, tag = 'output window, operand 0']
    %10 = vsyncpa [#allocation3], 0
    %11 = vsyncpa [#allocation4], 0
    %s12 = scalar_lea.sflag [#allocation4], 1
    %13 = vsyncpa %s12, 0
    loop: start=0, step=1, limit=4
    $region2: #{tpu_custom_call.1} parent=1 // loop_pre_header
      _
    $region3: #{tpu_custom_call.1} parent=1 // loop_header
      %s15 = sphi 0, %s19
      %p16 = scmp.ge.s32.totalorder %s15, 4
      %s25 = sphi 0, %s27
      %s28 = sphi 0, %s25
      %s29 = sphi 0, %s28
      %s45 = sphi 0, %s29
      %s49 = sphi 0, %s49
      %s51 = sphi 0, %s49
      %s52 = sphi 0, %s51
      %s66 = sphi 0, %s52
      %s70 = sphi 0, %s70
      %s72 = sphi 0, %s70
      %s73 = sphi 0, %s72
      %s87 = sphi 0, %s73
      %s91 = sphi 0, %s91
      %s93 = sphi 0, %s91
      %s94 = sphi 0, %s93
      %s108 = sphi 0, %s94
      %s112 = sphi 0, %s112
      %s114 = sphi 0, %s112
      %s115 = sphi 0, %s114
      %s129 = sphi 0, %s115
      %s135 = sphi 0, %s137
      %s138 = sphi 0, %s135
      %s139 = sphi 0, %s138
      %s155 = sphi 0, %s139
    $region4: #{tpu_custom_call.1} parent=1 // loop_header_branch
      %18 = sbr.rel (%p16) target = $region8
    $region5: #{tpu_custom_call.1} parent=1 // loop_body
      %s20 = ssub.s32 %s15, 1
      %s21 = ssub.s32 %s15, 2
      %s22 = sadd.s32 %s15, 1
      %s23 = ssub.s32 %s15, %s22
      %p24 = scmp.eq.s32.totalorder %s23, 0
      %s26 = sadd.s32 %s25, 1
      %s27 = scalar_select %p24, %s25, %s26
      %p30 = pneg %p24
      %p31 = scmp.eq.s32.totalorder %s15, 1
      %p32 = por %p30, %p31
      %p33 = scmp.ne.s32.totalorder %s25, %s28
      %p34 = scmp.eq.s32.totalorder %s15, 0
      %p35 = por %p33, %p34
      %p36 = scmp.ne.s32.totalorder %s25, %s28
      %p37 = scmp.eq.s32.totalorder %s20, 1
      %p38 = por %p36, %p37
      %p39 = scmp.ne.s32.totalorder %s28, %s29
      %p40 = scmp.eq.s32.totalorder %s20, 0
      %p41 = por %p39, %p40
      %p42 = scmp.ne.s32.totalorder %s28, %s29
      %p43 = scmp.eq.s32.totalorder %s21, 1
      %p44 = por %p42, %p43
      %p46 = scmp.ne.s32.totalorder %s29, %s45
      %p47 = scmp.eq.s32.totalorder %s21, 0
      %p48 = por %p46, %p47
      %s50 = sadd.s32 %s49, 1
      %p53 = scmp.eq.s32.totalorder %s15, 1
      %p54 = scmp.ne.s32.totalorder %s49, %s51
      %p55 = scmp.eq.s32.totalorder %s15, 0
      %p56 = por %p54, %p55
      %p57 = scmp.ne.s32.totalorder %s49, %s51
      %p58 = scmp.eq.s32.totalorder %s20, 1
      %p59 = por %p57, %p58
      %p60 = scmp.ne.s32.totalorder %s51, %s52
      %p61 = scmp.eq.s32.totalorder %s20, 0
      %p62 = por %p60, %p61
      %p63 = scmp.ne.s32.totalorder %s51, %s52
      %p64 = scmp.eq.s32.totalorder %s21, 1
      %p65 = por %p63, %p64
      %p67 = scmp.ne.s32.totalorder %s52, %s66
      %p68 = scmp.eq.s32.totalorder %s21, 0
      %p69 = por %p67, %p68
      %s71 = sadd.s32 %s70, 1
      %p74 = scmp.eq.s32.totalorder %s15, 1
      %p75 = scmp.ne.s32.totalorder %s70, %s72
      %p76 = scmp.eq.s32.totalorder %s15, 0
      %p77 = por %p75, %p76
      %p78 = scmp.ne.s32.totalorder %s70, %s72
      %p79 = scmp.eq.s32.totalorder %s20, 1
      %p80 = por %p78, %p79
      %p81 = scmp.ne.s32.totalorder %s72, %s73
      %p82 = scmp.eq.s32.totalorder %s20, 0
      %p83 = por %p81, %p82
      %p84 = scmp.ne.s32.totalorder %s72, %s73
      %p85 = scmp.eq.s32.totalorder %s21, 1
      %p86 = por %p84, %p85
      %p88 = scmp.ne.s32.totalorder %s73, %s87
      %p89 = scmp.eq.s32.totalorder %s21, 0
      %p90 = por %p88, %p89
      %s92 = sadd.s32 %s91, 1
      %p95 = scmp.eq.s32.totalorder %s15, 1
      %p96 = scmp.ne.s32.totalorder %s91, %s93
      %p97 = scmp.eq.s32.totalorder %s15, 0
      %p98 = por %p96, %p97
      %p99 = scmp.ne.s32.totalorder %s91, %s93
      %p100 = scmp.eq.s32.totalorder %s20, 1
      %p101 = por %p99, %p100
      %p102 = scmp.ne.s32.totalorder %s93, %s94
      %p103 = scmp.eq.s32.totalorder %s20, 0
      %p104 = por %p102, %p103
      %p105 = scmp.ne.s32.totalorder %s93, %s94
      %p106 = scmp.eq.s32.totalorder %s21, 1
      %p107 = por %p105, %p106
      %p109 = scmp.ne.s32.totalorder %s94, %s108
      %p110 = scmp.eq.s32.totalorder %s21, 0
      %p111 = por %p109, %p110
      %s113 = sadd.s32 %s112, 1
      %p116 = scmp.eq.s32.totalorder %s15, 1
      %p117 = scmp.ne.s32.totalorder %s112, %s114
      %p118 = scmp.eq.s32.totalorder %s15, 0
      %p119 = por %p117, %p118
      %p120 = scmp.ne.s32.totalorder %s112, %s114
      %p121 = scmp.eq.s32.totalorder %s20, 1
      %p122 = por %p120, %p121
      %p123 = scmp.ne.s32.totalorder %s114, %s115
      %p124 = scmp.eq.s32.totalorder %s20, 0
      %p125 = por %p123, %p124
      %p126 = scmp.ne.s32.totalorder %s114, %s115
      %p127 = scmp.eq.s32.totalorder %s21, 1
      %p128 = por %p126, %p127
      %p130 = scmp.ne.s32.totalorder %s115, %s129
      %p131 = scmp.eq.s32.totalorder %s21, 0
      %p132 = por %p130, %p131
      %s133 = ssub.s32 %s15, %s22
      %p134 = scmp.eq.s32.totalorder %s133, 0
      %s136 = sadd.s32 %s135, 1
      %s137 = scalar_select %p134, %s135, %s136
      %p140 = pneg %p134
      %p141 = scmp.eq.s32.totalorder %s15, 1
      %p142 = por %p140, %p141
      %p143 = scmp.ne.s32.totalorder %s135, %s138
      %p144 = scmp.eq.s32.totalorder %s15, 0
      %p145 = por %p143, %p144
      %p146 = scmp.ne.s32.totalorder %s135, %s138
      %p147 = scmp.eq.s32.totalorder %s20, 1
      %p148 = por %p146, %p147
      %p149 = scmp.ne.s32.totalorder %s138, %s139
      %p150 = scmp.eq.s32.totalorder %s20, 0
      %p151 = por %p149, %p150
      %p152 = scmp.ne.s32.totalorder %s138, %s139
      %p153 = scmp.eq.s32.totalorder %s21, 1
      %p154 = por %p152, %p153
      %p156 = scmp.ne.s32.totalorder %s139, %s155
      %p157 = scmp.eq.s32.totalorder %s21, 0
      %p158 = por %p156, %p157
      %p159 = scmp.le.s32.totalorder 1, %s15
      %p160 = scmp.lt.s32.totalorder %s15, 3
      %p161 = pnand %p159, %p160
      %p162 = pneg %p161
      // Predicated region
      $region9: #{tpu_custom_call.1} parent=5 // pred_check
        _
      $region10: #{tpu_custom_call.1} parent=5 // pred_check_branch
        %164 = sbr.rel (%p161) target = $region12
      $region11: #{tpu_custom_call.1} parent=5 // pred_region
        %s165 = ssub.s32 %s15, 1
        // Predicated region
        $region13: #{tpu_custom_call.1} parent=11 // pred_check
          %p166 = pneg %p62
        $region14: #{tpu_custom_call.1} parent=11 // pred_check_branch
          %168 = sbr.rel (%p166) target = $region16
        $region15: #{tpu_custom_call.1} parent=11 // pred_region
          _
        $region16: #{tpu_custom_call.1} parent=11 // pred_fallthru
          _
        // Predicated region
        $region17: #{tpu_custom_call.1} parent=11 // pred_check
          %p169 = pneg %p83
        $region18: #{tpu_custom_call.1} parent=11 // pred_check_branch
          %171 = sbr.rel (%p169) target = $region20
        $region19: #{tpu_custom_call.1} parent=11 // pred_region
          _
        $region20: #{tpu_custom_call.1} parent=11 // pred_fallthru
          _
        // Predicated region
        $region21: #{tpu_custom_call.1} parent=11 // pred_check
          %p172 = pneg %p104
        $region22: #{tpu_custom_call.1} parent=11 // pred_check_branch
          %174 = sbr.rel (%p172) target = $region24
        $region23: #{tpu_custom_call.1} parent=11 // pred_region
          %176 = vsyncadd [#allocation3], 0
          %s177 = sshll.u32 %s3, 4
          %s178 = int_to_ptr.hbm [resolvable:$true] %s177
          %s179 = sshll.u32 [#allocation2], 4
          %s180 = int_to_ptr.vmem [resolvable:$true] %s179
          %185 = dma.hbm_to_vmem [thread:$0]  %s178, 14336, %s180, [#allocation3], 448, 448, 28
        $region24: #{tpu_custom_call.1} parent=11 // pred_fallthru
          _
        // Predicated region
        $region25: #{tpu_custom_call.1} parent=11 // pred_check
          %p186 = pneg %p125
        $region26: #{tpu_custom_call.1} parent=11 // pred_check_branch
          %188 = sbr.rel (%p186) target = $region28
        $region27: #{tpu_custom_call.1} parent=11 // pred_region
          _
        $region28: #{tpu_custom_call.1} parent=11 // pred_fallthru
          _
      $region12: #{tpu_custom_call.1} parent=5 // pred_fallthru
        _
      %p189 = scmp.lt.s32.totalorder %s15, 2
      // Predicated region
      $region29: #{tpu_custom_call.1} parent=5 // pred_check
        %p190 = pneg %p189
      $region30: #{tpu_custom_call.1} parent=5 // pred_check_branch
        %192 = sbr.rel (%p190) target = $region32
      $region31: #{tpu_custom_call.1} parent=5 // pred_region
        // Predicated region
        $region33: #{tpu_custom_call.1} parent=31 // pred_check
          %p193 = pneg %p35
        $region34: #{tpu_custom_call.1} parent=31 // pred_check_branch
          %195 = sbr.rel (%p193) target = $region36
        $region35: #{tpu_custom_call.1} parent=31 // pred_region
          %s196 = smul.u32 16, %s15
          %p197 = scmp.lt.s32.totalorder %s196, 31
          %s198 = scalar_select %p197, %s196, 31
          %s199 = smul.addr %s198, 4
          %s200 = scalar_lea.vmem %s0, %s199
          %s201 = smul.u32 16, %s15
        $region36: #{tpu_custom_call.1} parent=31 // pred_fallthru
          _
      $region32: #{tpu_custom_call.1} parent=5 // pred_fallthru
        _
      %p202 = scmp.le.s32.totalorder 1, %s15
      %p203 = scmp.lt.s32.totalorder %s15, 3
      %p204 = pnand %p202, %p203
      %p205 = pneg %p204
      // Predicated region
      $region37: #{tpu_custom_call.1} parent=5 // pred_check
        _
      $region38: #{tpu_custom_call.1} parent=5 // pred_check_branch
        %207 = sbr.rel (%p204) target = $region40
      $region39: #{tpu_custom_call.1} parent=5 // pred_region
        %s208 = ssub.s32 %s15, 1
        // Predicated region
        $region41: #{tpu_custom_call.1} parent=39 // pred_check
          %p209 = pneg %p104
        $region42: #{tpu_custom_call.1} parent=39 // pred_check_branch
          %211 = sbr.rel (%p209) target = $region44
        $region43: #{tpu_custom_call.1} parent=39 // pred_region
          %213 = dma.done [#allocation3], 14336
        $region44: #{tpu_custom_call.1} parent=39 // pred_fallthru
          _
        %s214 = smul.u32 16, %s20
        %p215 = scmp.lt.s32.totalorder %s214, 31
        %s216 = scalar_select %p215, %s214, 31
        %s217 = smul.addr %s216, 4
        %s218 = scalar_lea.vmem %s0, %s217
        %p219 = pneg %p41
        %p220 = pneg %p38
        %p221 = pneg %p62
        %p222 = pneg %p59
        %p223 = pneg %p83
        %p224 = pneg %p80
        %p225 = pneg %p104
        %p226 = pneg %p101
        %p227 = pneg %p125
        %p228 = pneg %p122
        %p229 = pneg %p151
        %p230 = pneg %p148
        %s231 = sand.u32 %s138, 1
        %s232 = scalar_lea.sflag [#allocation4], %s231
        %s233 = sand.u32 %s138, 1
        %s234 = smul.addr %s233, 896
        %s235 = scalar_lea.vmem [#allocation5], %s234
        %s236 = smul.u32 16, %s20
        %p237 = scmp.lt.s32.totalorder %s236, 31
        %s238 = scalar_select %p237, %s236, 31
        %s239 = smul.addr %s238, 4
        %s240 = scalar_lea.vmem %s0, %s239
        %s241 = smul.u32 16, %s20
        %s242 = smul.u32 16, %s20
        %v244 = vld [vmem:[%s240] sm:$0xf]
        %v245 = vld [vmem:[%s240 + $0x4] sm:$0xf]
        %v246 = vld [vmem:[%s240 + $0x8] sm:$0xf]
        %v247 = vld [vmem:[%s240 + $0xc] sm:$0xf]
        %v248 = vld [vmem:[%s240 + $0x10] sm:$0xf]
        %v249 = vld [vmem:[%s240 + $0x14] sm:$0xf]
        %v250 = vld [vmem:[%s240 + $0x18] sm:$0xf]
        %v251 = vld [vmem:[%s240 + $0x1c] sm:$0xf]
        %v252 = vld [vmem:[%s240 + $0x20] sm:$0xf]
        %v253 = vld [vmem:[%s240 + $0x24] sm:$0xf]
        %v254 = vld [vmem:[%s240 + $0x28] sm:$0xf]
        %v255 = vld [vmem:[%s240 + $0x2c] sm:$0xf]
        %v256 = vld [vmem:[%s240 + $0x30] sm:$0xf]
        %v257 = vld [vmem:[%s240 + $0x34] sm:$0xf]
        %v258 = vld [vmem:[%s240 + $0x38] sm:$0xf]
        %v259 = vld [vmem:[%s240 + $0x3c] sm:$0xf]
        %v260 = vld [vmem:[%s1] sm:$0xff]
        %v261 = vld [vmem:[%s1 + $0x8] sm:$0xff]
        %v262 = vld [vmem:[%s1 + $0x10] sm:$0xff]
        %v263 = vld [vmem:[%s1 + $0x18] sm:$0xff]
        %v264 = vld [vmem:[%s1 + $0x20] sm:$0xff]
        %v265 = vld [vmem:[%s1 + $0x28] sm:$0xff]
        %v266 = vld [vmem:[%s1 + $0x30] sm:$0xff]
        %v267 = vld [vmem:[%s1 + $0x38] sm:$0xff]
        %v268 = vld [vmem:[%s2] sm:$0x3]
        %v270 = vperm.slane %v268, 0
        %v271 = vperm.slane %v268, 1
        %v290 = vunpack.c.l.b16 %v244
        %v291 = vunpack.c.l.b16 %v245
        %v292 = vunpack.c.l.b16 %v246
        %v293 = vunpack.c.l.b16 %v247
        %v294 = vunpack.c.l.b16 %v248
        %v295 = vunpack.c.l.b16 %v249
        %v296 = vunpack.c.l.b16 %v250
        %v297 = vunpack.c.l.b16 %v251
        %v298 = vunpack.c.l.b16 %v252
        %v299 = vunpack.c.l.b16 %v253
        %v300 = vunpack.c.l.b16 %v254
        %v301 = vunpack.c.l.b16 %v255
        %v302 = vunpack.c.l.b16 %v256
        %v303 = vunpack.c.l.b16 %v257
        %v304 = vunpack.c.l.b16 %v258
        %v305 = vunpack.c.l.b16 %v259
        %v306 = vpack.c.b16 %v291, %v290
        %v307 = vpack.c.b16 %v293, %v292
        %v308 = vpack.c.b16 %v295, %v294
        %v309 = vpack.c.b16 %v297, %v296
        %v310 = vpack.c.b16 %v299, %v298
        %v311 = vpack.c.b16 %v301, %v300
        %v312 = vpack.c.b16 %v303, %v302
        %v313 = vpack.c.b16 %v305, %v304
        %v322 = vunpack.c.l.b16 %v260
        %v323 = vunpack.c.h.b16 %v260
        %v324 = vunpack.c.l.b16 %v261
        %v325 = vunpack.c.h.b16 %v261
        %v326 = vunpack.c.l.b16 %v262
        %v327 = vunpack.c.h.b16 %v262
        %v328 = vunpack.c.l.b16 %v263
        %v329 = vunpack.c.h.b16 %v263
        %v330 = vunpack.c.l.b16 %v264
        %v331 = vunpack.c.h.b16 %v264
        %v332 = vunpack.c.l.b16 %v265
        %v333 = vunpack.c.h.b16 %v265
        %v334 = vunpack.c.l.b16 %v266
        %v335 = vunpack.c.h.b16 %v266
        %v336 = vunpack.c.l.b16 %v267
        %v337 = vunpack.c.h.b16 %v267
        %v338 = vpack.c.b16 %v324, %v322
        %v339 = vpack.c.b16 %v325, %v323
        %v340 = vpack.c.b16 %v328, %v326
        %v341 = vpack.c.b16 %v329, %v327
        %v342 = vpack.c.b16 %v332, %v330
        %v343 = vpack.c.b16 %v333, %v331
        %v344 = vpack.c.b16 %v336, %v334
        %v345 = vpack.c.b16 %v337, %v335
        %vm354 = vcmask 523264
        %v356 = vsel %vm354, %v306, 0
        %v359 = vsel %vm354, %v307, 0
        %v362 = vsel %vm354, %v308, 0
        %v365 = vsel %vm354, %v309, 0
        %v368 = vsel %vm354, %v310, 0
        %v371 = vsel %vm354, %v311, 0
        %v374 = vsel %vm354, %v312, 0
        %v377 = vsel %vm354, %v313, 0
        %379 = vmatpush.bf16.msra.mxu0 0
        %380 = vmatpush.bf16.msra.mxu0 0
        %381 = vmatpush.bf16.msra.mxu0 0
        %382 = vmatpush.bf16.msra.mxu0 0
        %383 = vmatpush.bf16.msra.mxu0 %v344
        %384 = vmatpush.bf16.msra.mxu0 %v342
        %385 = vmatpush.bf16.msra.mxu0 %v340
        %386 = vmatpush.bf16.msra.mxu0 %v338
        %387 = vmatmul.bf16.gmra.mxu0 %v356
        %v388 = vpop.f32.mrf.mxu0
        %v389 = vadd.f32 %v270, %v388
        %v390 = vpop.f32.mrf.mxu0
        %v391 = vadd.f32 %v270, %v390
        %392 = vmatmul.bf16.gmra.mxu0 %v359
        %v393 = vpop.f32.mrf.mxu0
        %v394 = vadd.f32 %v270, %v393
        %v395 = vpop.f32.mrf.mxu0
        %v396 = vadd.f32 %v270, %v395
        %397 = vmatmul.bf16.gmra.mxu0 %v362
        %v398 = vpop.f32.mrf.mxu0
        %v399 = vadd.f32 %v270, %v398
        %v400 = vpop.f32.mrf.mxu0
        %v401 = vadd.f32 %v270, %v400
        %402 = vmatmul.bf16.gmra.mxu0 %v365
        %v403 = vpop.f32.mrf.mxu0
        %v404 = vadd.f32 %v270, %v403
        %v405 = vpop.f32.mrf.mxu0
        %v406 = vadd.f32 %v270, %v405
        %407 = vmatmul.bf16.gmra.mxu0 %v368
        %v408 = vpop.f32.mrf.mxu0
        %v409 = vadd.f32 %v270, %v408
        %v410 = vpop.f32.mrf.mxu0
        %v411 = vadd.f32 %v270, %v410
        %412 = vmatmul.bf16.gmra.mxu0 %v371
        %v413 = vpop.f32.mrf.mxu0
        %v414 = vadd.f32 %v270, %v413
        %v415 = vpop.f32.mrf.mxu0
        %v416 = vadd.f32 %v270, %v415
        %417 = vmatmul.bf16.gmra.mxu0 %v374
        %v418 = vpop.f32.mrf.mxu0
        %v419 = vadd.f32 %v270, %v418
        %v420 = vpop.f32.mrf.mxu0
        %v421 = vadd.f32 %v270, %v420
        %422 = vmatmul.bf16.gmra.mxu0 %v377
        %v423 = vpop.f32.mrf.mxu0
        %v424 = vadd.f32 %v270, %v423
        %v425 = vpop.f32.mrf.mxu0
        %v426 = vadd.f32 %v270, %v425
        %427 = vdwg.mxu0
        %428 = vmatpush.bf16.msra.mxu0 0
        %429 = vmatpush.bf16.msra.mxu0 0
        %430 = vmatpush.bf16.msra.mxu0 0
        %431 = vmatpush.bf16.msra.mxu0 0
        %432 = vmatpush.bf16.msra.mxu0 %v345
        %433 = vmatpush.bf16.msra.mxu0 %v343
        %434 = vmatpush.bf16.msra.mxu0 %v341
        %435 = vmatpush.bf16.msra.mxu0 %v339
        %436 = vmatmul.bf16.gmra.mxu0 %v356
        %v437 = vpop.f32.mrf.mxu0
        %v438 = vadd.f32 %v271, %v437
        %v439 = vpop.f32.mrf.mxu0
        %v440 = vadd.f32 %v271, %v439
        %441 = vmatmul.bf16.gmra.mxu0 %v359
        %v442 = vpop.f32.mrf.mxu0
        %v443 = vadd.f32 %v271, %v442
        %v444 = vpop.f32.mrf.mxu0
        %v445 = vadd.f32 %v271, %v444
        %446 = vmatmul.bf16.gmra.mxu0 %v362
        %v447 = vpop.f32.mrf.mxu0
        %v448 = vadd.f32 %v271, %v447
        %v449 = vpop.f32.mrf.mxu0
        %v450 = vadd.f32 %v271, %v449
        %451 = vmatmul.bf16.gmra.mxu0 %v365
        %v452 = vpop.f32.mrf.mxu0
        %v453 = vadd.f32 %v271, %v452
        %v454 = vpop.f32.mrf.mxu0
        %v455 = vadd.f32 %v271, %v454
        %456 = vmatmul.bf16.gmra.mxu0 %v368
        %v457 = vpop.f32.mrf.mxu0
        %v458 = vadd.f32 %v271, %v457
        %v459 = vpop.f32.mrf.mxu0
        %v460 = vadd.f32 %v271, %v459
        %461 = vmatmul.bf16.gmra.mxu0 %v371
        %v462 = vpop.f32.mrf.mxu0
        %v463 = vadd.f32 %v271, %v462
        %v464 = vpop.f32.mrf.mxu0
        %v465 = vadd.f32 %v271, %v464
        %466 = vmatmul.bf16.gmra.mxu0 %v374
        %v467 = vpop.f32.mrf.mxu0
        %v468 = vadd.f32 %v271, %v467
        %v469 = vpop.f32.mrf.mxu0
        %v470 = vadd.f32 %v271, %v469
        %471 = vmatmul.bf16.gmra.mxu0 %v377
        %v472 = vpop.f32.mrf.mxu0
        %v473 = vadd.f32 %v271, %v472
        %v474 = vpop.f32.mrf.mxu0
        %v475 = vadd.f32 %v271, %v474
        %476 = vdwg.mxu0
        %v477 = vmul.f32 %v389, 0.01
        %v478 = vmul.f32 %v438, 0.01
        %v479 = vmul.f32 %v391, 0.01
        %v480 = vmul.f32 %v440, 0.01
        %v481 = vmul.f32 %v394, 0.01
        %v482 = vmul.f32 %v443, 0.01
        %v483 = vmul.f32 %v396, 0.01
        %v484 = vmul.f32 %v445, 0.01
        %v485 = vmul.f32 %v399, 0.01
        %v486 = vmul.f32 %v448, 0.01
        %v487 = vmul.f32 %v401, 0.01
        %v488 = vmul.f32 %v450, 0.01
        %v489 = vmul.f32 %v404, 0.01
        %v490 = vmul.f32 %v453, 0.01
        %v491 = vmul.f32 %v406, 0.01
        %v492 = vmul.f32 %v455, 0.01
        %v493 = vmul.f32 %v409, 0.01
        %v494 = vmul.f32 %v458, 0.01
        %v495 = vmul.f32 %v411, 0.01
        %v496 = vmul.f32 %v460, 0.01
        %v497 = vmul.f32 %v414, 0.01
        %v498 = vmul.f32 %v463, 0.01
        %v499 = vmul.f32 %v416, 0.01
        %v500 = vmul.f32 %v465, 0.01
        %v501 = vmul.f32 %v419, 0.01
        %v502 = vmul.f32 %v468, 0.01
        %v503 = vmul.f32 %v421, 0.01
        %v504 = vmul.f32 %v470, 0.01
        %v505 = vmul.f32 %v424, 0.01
        %v506 = vmul.f32 %v473, 0.01
        %v507 = vmul.f32 %v426, 0.01
        %v508 = vmul.f32 %v475, 0.01
        %v509 = vmax.f32 %v389, %v477
        %v510 = vmax.f32 %v438, %v478
        %v511 = vmax.f32 %v391, %v479
        %v512 = vmax.f32 %v440, %v480
        %v513 = vmax.f32 %v394, %v481
        %v514 = vmax.f32 %v443, %v482
        %v515 = vmax.f32 %v396, %v483
        %v516 = vmax.f32 %v445, %v484
        %v517 = vmax.f32 %v399, %v485
        %v518 = vmax.f32 %v448, %v486
        %v519 = vmax.f32 %v401, %v487
        %v520 = vmax.f32 %v450, %v488
        %v521 = vmax.f32 %v404, %v489
        %v522 = vmax.f32 %v453, %v490
        %v523 = vmax.f32 %v406, %v491
        %v524 = vmax.f32 %v455, %v492
        %v525 = vmax.f32 %v409, %v493
        %v526 = vmax.f32 %v458, %v494
        %v527 = vmax.f32 %v411, %v495
        %v528 = vmax.f32 %v460, %v496
        %v529 = vmax.f32 %v414, %v497
        %v530 = vmax.f32 %v463, %v498
        %v531 = vmax.f32 %v416, %v499
        %v532 = vmax.f32 %v465, %v500
        %v533 = vmax.f32 %v419, %v501
        %v534 = vmax.f32 %v468, %v502
        %v535 = vmax.f32 %v421, %v503
        %v536 = vmax.f32 %v470, %v504
        %v537 = vmax.f32 %v424, %v505
        %v538 = vmax.f32 %v473, %v506
        %v539 = vmax.f32 %v426, %v507
        %v540 = vmax.f32 %v475, %v508
        %v541 = vpack.c.bf16 %v511, %v509
        %v542 = vpack.c.bf16 %v512, %v510
        %v543 = vpack.c.bf16 %v515, %v513
        %v544 = vpack.c.bf16 %v516, %v514
        %v545 = vpack.c.bf16 %v519, %v517
        %v546 = vpack.c.bf16 %v520, %v518
        %v547 = vpack.c.bf16 %v523, %v521
        %v548 = vpack.c.bf16 %v524, %v522
        %v549 = vpack.c.bf16 %v527, %v525
        %v550 = vpack.c.bf16 %v528, %v526
        %v551 = vpack.c.bf16 %v531, %v529
        %v552 = vpack.c.bf16 %v532, %v530
        %v553 = vpack.c.bf16 %v535, %v533
        %v554 = vpack.c.bf16 %v536, %v534
        %v555 = vpack.c.bf16 %v539, %v537
        %v556 = vpack.c.bf16 %v540, %v538
        %v557 = vld [vmem:[#allocation2] sm:$0xff]
        %v558 = vld [vmem:[#allocation2 + $0x8] sm:$0xff]
        %v559 = vld [vmem:[#allocation2 + $0x10] sm:$0xff]
        %v560 = vld [vmem:[#allocation2 + $0x18] sm:$0xf]
        %v561 = vld [vmem:[#allocation2 + $0x1c] sm:$0xff]
        %v562 = vld [vmem:[#allocation2 + $0x24] sm:$0xff]
        %v563 = vld [vmem:[#allocation2 + $0x2c] sm:$0xff]
        %v564 = vld [vmem:[#allocation2 + $0x34] sm:$0xf]
        %v565 = vld [vmem:[#allocation2 + $0x38] sm:$0xff]
        %v566 = vld [vmem:[#allocation2 + $0x40] sm:$0xff]
        %v567 = vld [vmem:[#allocation2 + $0x48] sm:$0xff]
        %v568 = vld [vmem:[#allocation2 + $0x50] sm:$0xf]
        %v569 = vld [vmem:[#allocation2 + $0x54] sm:$0xff]
        %v570 = vld [vmem:[#allocation2 + $0x5c] sm:$0xff]
        %v571 = vld [vmem:[#allocation2 + $0x64] sm:$0xff]
        %v572 = vld [vmem:[#allocation2 + $0x6c] sm:$0xf]
        %v573 = vld [vmem:[#allocation2 + $0x70] sm:$0xff]
        %v574 = vld [vmem:[#allocation2 + $0x78] sm:$0xff]
        %v575 = vld [vmem:[#allocation2 + $0x80] sm:$0xff]
        %v576 = vld [vmem:[#allocation2 + $0x88] sm:$0xf]
        %v577 = vld [vmem:[#allocation2 + $0x8c] sm:$0xff]
        %v578 = vld [vmem:[#allocation2 + $0x94] sm:$0xff]
        %v579 = vld [vmem:[#allocation2 + $0x9c] sm:$0xff]
        %v580 = vld [vmem:[#allocation2 + $0xa4] sm:$0xf]
        %v581 = vld [vmem:[#allocation2 + $0xa8] sm:$0xff]
        %v582 = vld [vmem:[#allocation2 + $0xb0] sm:$0xff]
        %v583 = vld [vmem:[#allocation2 + $0xb8] sm:$0xff]
        %v584 = vld [vmem:[#allocation2 + $0xc0] sm:$0xf]
        %v585 = vld [vmem:[#allocation2 + $0xc4] sm:$0xff]
        %v586 = vld [vmem:[#allocation2 + $0xcc] sm:$0xff]
        %v587 = vld [vmem:[#allocation2 + $0xd4] sm:$0xff]
        %v588 = vld [vmem:[#allocation2 + $0xdc] sm:$0xf]
        %v589 = vld [vmem:[#allocation2 + $0xe0] sm:$0xff]
        %v590 = vld [vmem:[#allocation2 + $0xe8] sm:$0xff]
        %v591 = vld [vmem:[#allocation2 + $0xf0] sm:$0xff]
        %v592 = vld [vmem:[#allocation2 + $0xf8] sm:$0xf]
        %v593 = vld [vmem:[#allocation2 + $0xfc] sm:$0xff]
        %v594 = vld [vmem:[#allocation2 + $0x104] sm:$0xff]
        %v595 = vld [vmem:[#allocation2 + $0x10c] sm:$0xff]
        %v596 = vld [vmem:[#allocation2 + $0x114] sm:$0xf]
        %v597 = vld [vmem:[#allocation2 + $0x118] sm:$0xff]
        %v598 = vld [vmem:[#allocation2 + $0x120] sm:$0xff]
        %v599 = vld [vmem:[#allocation2 + $0x128] sm:$0xff]
        %v600 = vld [vmem:[#allocation2 + $0x130] sm:$0xf]
        %v601 = vld [vmem:[#allocation2 + $0x134] sm:$0xff]
        %v602 = vld [vmem:[#allocation2 + $0x13c] sm:$0xff]
        %v603 = vld [vmem:[#allocation2 + $0x144] sm:$0xff]
        %v604 = vld [vmem:[#allocation2 + $0x14c] sm:$0xf]
        %v605 = vld [vmem:[#allocation2 + $0x150] sm:$0xff]
        %v606 = vld [vmem:[#allocation2 + $0x158] sm:$0xff]
        %v607 = vld [vmem:[#allocation2 + $0x160] sm:$0xff]
        %v608 = vld [vmem:[#allocation2 + $0x168] sm:$0xf]
        %v609 = vld [vmem:[#allocation2 + $0x16c] sm:$0xff]
        %v610 = vld [vmem:[#allocation2 + $0x174] sm:$0xff]
        %v611 = vld [vmem:[#allocation2 + $0x17c] sm:$0xff]
        %v612 = vld [vmem:[#allocation2 + $0x184] sm:$0xf]
        %v613 = vld [vmem:[#allocation2 + $0x188] sm:$0xff]
        %v614 = vld [vmem:[#allocation2 + $0x190] sm:$0xff]
        %v615 = vld [vmem:[#allocation2 + $0x198] sm:$0xff]
        %v616 = vld [vmem:[#allocation2 + $0x1a0] sm:$0xf]
        %v617 = vld [vmem:[#allocation2 + $0x1a4] sm:$0xff]
        %v618 = vld [vmem:[#allocation2 + $0x1ac] sm:$0xff]
        %v619 = vld [vmem:[#allocation2 + $0x1b4] sm:$0xff]
        %v620 = vld [vmem:[#allocation2 + $0x1bc] sm:$0xf]
        %v621 = vld [vmem:[#allocation2 + $0x1c0] sm:$0xff]
        %v622 = vld [vmem:[#allocation2 + $0x1c8] sm:$0xff]
        %v623 = vld [vmem:[#allocation2 + $0x1d0] sm:$0xff]
        %v624 = vld [vmem:[#allocation2 + $0x1d8] sm:$0xf]
        %v625 = vld [vmem:[#allocation2 + $0x1dc] sm:$0xff]
        %v626 = vld [vmem:[#allocation2 + $0x1e4] sm:$0xff]
        %v627 = vld [vmem:[#allocation2 + $0x1ec] sm:$0xff]
        %v628 = vld [vmem:[#allocation2 + $0x1f4] sm:$0xf]
        %v629 = vld [vmem:[#allocation2 + $0x1f8] sm:$0xff]
        %v630 = vld [vmem:[#allocation2 + $0x200] sm:$0xff]
        %v631 = vld [vmem:[#allocation2 + $0x208] sm:$0xff]
        %v632 = vld [vmem:[#allocation2 + $0x210] sm:$0xf]
        %v633 = vld [vmem:[#allocation2 + $0x214] sm:$0xff]
        %v634 = vld [vmem:[#allocation2 + $0x21c] sm:$0xff]
        %v635 = vld [vmem:[#allocation2 + $0x224] sm:$0xff]
        %v636 = vld [vmem:[#allocation2 + $0x22c] sm:$0xf]
        %v637 = vld [vmem:[#allocation2 + $0x230] sm:$0xff]
        %v638 = vld [vmem:[#allocation2 + $0x238] sm:$0xff]
        %v639 = vld [vmem:[#allocation2 + $0x240] sm:$0xff]
        %v640 = vld [vmem:[#allocation2 + $0x248] sm:$0xf]
        %v641 = vld [vmem:[#allocation2 + $0x24c] sm:$0xff]
        %v642 = vld [vmem:[#allocation2 + $0x254] sm:$0xff]
        %v643 = vld [vmem:[#allocation2 + $0x25c] sm:$0xff]
        %v644 = vld [vmem:[#allocation2 + $0x264] sm:$0xf]
        %v645 = vld [vmem:[#allocation2 + $0x268] sm:$0xff]
        %v646 = vld [vmem:[#allocation2 + $0x270] sm:$0xff]
        %v647 = vld [vmem:[#allocation2 + $0x278] sm:$0xff]
        %v648 = vld [vmem:[#allocation2 + $0x280] sm:$0xf]
        %v649 = vld [vmem:[#allocation2 + $0x284] sm:$0xff]
        %v650 = vld [vmem:[#allocation2 + $0x28c] sm:$0xff]
        %v651 = vld [vmem:[#allocation2 + $0x294] sm:$0xff]
        %v652 = vld [vmem:[#allocation2 + $0x29c] sm:$0xf]
        %v653 = vld [vmem:[#allocation2 + $0x2a0] sm:$0xff]
        %v654 = vld [vmem:[#allocation2 + $0x2a8] sm:$0xff]
        %v655 = vld [vmem:[#allocation2 + $0x2b0] sm:$0xff]
        %v656 = vld [vmem:[#allocation2 + $0x2b8] sm:$0xf]
        %v657 = vld [vmem:[#allocation2 + $0x2bc] sm:$0xff]
        %v658 = vld [vmem:[#allocation2 + $0x2c4] sm:$0xff]
        %v659 = vld [vmem:[#allocation2 + $0x2cc] sm:$0xff]
        %v660 = vld [vmem:[#allocation2 + $0x2d4] sm:$0xf]
        %v661 = vld [vmem:[#allocation2 + $0x2d8] sm:$0xff]
        %v662 = vld [vmem:[#allocation2 + $0x2e0] sm:$0xff]
        %v663 = vld [vmem:[#allocation2 + $0x2e8] sm:$0xff]
        %v664 = vld [vmem:[#allocation2 + $0x2f0] sm:$0xf]
        %v665 = vld [vmem:[#allocation2 + $0x2f4] sm:$0xff]
        %v666 = vld [vmem:[#allocation2 + $0x2fc] sm:$0xff]
        %v667 = vld [vmem:[#allocation2 + $0x304] sm:$0xff]
        %v668 = vld [vmem:[#allocation2 + $0x30c] sm:$0xf]
        %v669 = vld [vmem:[#allocation2 + $0x310] sm:$0xff]
        %v670 = vld [vmem:[#allocation2 + $0x318] sm:$0xff]
        %v671 = vld [vmem:[#allocation2 + $0x320] sm:$0xff]
        %v672 = vld [vmem:[#allocation2 + $0x328] sm:$0xf]
        %v673 = vld [vmem:[#allocation2 + $0x32c] sm:$0xff]
        %v674 = vld [vmem:[#allocation2 + $0x334] sm:$0xff]
        %v675 = vld [vmem:[#allocation2 + $0x33c] sm:$0xff]
        %v676 = vld [vmem:[#allocation2 + $0x344] sm:$0xf]
        %v677 = vld [vmem:[#allocation2 + $0x348] sm:$0xff]
        %v678 = vld [vmem:[#allocation2 + $0x350] sm:$0xff]
        %v679 = vld [vmem:[#allocation2 + $0x358] sm:$0xff]
        %v680 = vld [vmem:[#allocation2 + $0x360] sm:$0xf]
        %v681 = vld [vmem:[#allocation2 + $0x364] sm:$0xff]
        %v682 = vld [vmem:[#allocation2 + $0x36c] sm:$0xff]
        %v683 = vld [vmem:[#allocation2 + $0x374] sm:$0xff]
        %v684 = vld [vmem:[#allocation2 + $0x37c] sm:$0xf]
        %v685 = vld [vmem:[%s4] sm:$0xff]
        %v687 = vperm.slane %v685, 0
        %v688 = vperm.slane %v685, 1
        %v689 = vperm.slane %v685, 2
        %v690 = vperm.slane %v685, 3
        %v691 = vperm.slane %v685, 4
        %v692 = vperm.slane %v685, 5
        %v693 = vperm.slane %v685, 6
        %v829 = vunpack.c.l.b16 %v557
        %v830 = vunpack.c.h.b16 %v557
        %v831 = vunpack.c.l.b16 %v558
        %v832 = vunpack.c.h.b16 %v558
        %v833 = vunpack.c.l.b16 %v559
        %v834 = vunpack.c.h.b16 %v559
        %v835 = vunpack.c.l.b16 %v560
        %v836 = vunpack.c.l.b16 %v561
        %v837 = vunpack.c.h.b16 %v561
        %v838 = vunpack.c.l.b16 %v562
        %v839 = vunpack.c.h.b16 %v562
        %v840 = vunpack.c.l.b16 %v563
        %v841 = vunpack.c.h.b16 %v563
        %v842 = vunpack.c.l.b16 %v564
        %v843 = vunpack.c.l.b16 %v565
        %v844 = vunpack.c.h.b16 %v565
        %v845 = vunpack.c.l.b16 %v566
        %v846 = vunpack.c.h.b16 %v566
        %v847 = vunpack.c.l.b16 %v567
        %v848 = vunpack.c.h.b16 %v567
        %v849 = vunpack.c.l.b16 %v568
        %v850 = vunpack.c.l.b16 %v569
        %v851 = vunpack.c.h.b16 %v569
        %v852 = vunpack.c.l.b16 %v570
        %v853 = vunpack.c.h.b16 %v570
        %v854 = vunpack.c.l.b16 %v571
        %v855 = vunpack.c.h.b16 %v571
        %v856 = vunpack.c.l.b16 %v572
        %v857 = vunpack.c.l.b16 %v573
        %v858 = vunpack.c.h.b16 %v573
        %v859 = vunpack.c.l.b16 %v574
        %v860 = vunpack.c.h.b16 %v574
        %v861 = vunpack.c.l.b16 %v575
        %v862 = vunpack.c.h.b16 %v575
        %v863 = vunpack.c.l.b16 %v576
        %v864 = vunpack.c.l.b16 %v577
        %v865 = vunpack.c.h.b16 %v577
        %v866 = vunpack.c.l.b16 %v578
        %v867 = vunpack.c.h.b16 %v578
        %v868 = vunpack.c.l.b16 %v579
        %v869 = vunpack.c.h.b16 %v579
        %v870 = vunpack.c.l.b16 %v580
        %v871 = vunpack.c.l.b16 %v581
        %v872 = vunpack.c.h.b16 %v581
        %v873 = vunpack.c.l.b16 %v582
        %v874 = vunpack.c.h.b16 %v582
        %v875 = vunpack.c.l.b16 %v583
        %v876 = vunpack.c.h.b16 %v583
        %v877 = vunpack.c.l.b16 %v584
        %v878 = vunpack.c.l.b16 %v585
        %v879 = vunpack.c.h.b16 %v585
        %v880 = vunpack.c.l.b16 %v586
        %v881 = vunpack.c.h.b16 %v586
        %v882 = vunpack.c.l.b16 %v587
        %v883 = vunpack.c.h.b16 %v587
        %v884 = vunpack.c.l.b16 %v588
        %v885 = vunpack.c.l.b16 %v589
        %v886 = vunpack.c.h.b16 %v589
        %v887 = vunpack.c.l.b16 %v590
        %v888 = vunpack.c.h.b16 %v590
        %v889 = vunpack.c.l.b16 %v591
        %v890 = vunpack.c.h.b16 %v591
        %v891 = vunpack.c.l.b16 %v592
        %v892 = vunpack.c.l.b16 %v593
        %v893 = vunpack.c.h.b16 %v593
        %v894 = vunpack.c.l.b16 %v594
        %v895 = vunpack.c.h.b16 %v594
        %v896 = vunpack.c.l.b16 %v595
        %v897 = vunpack.c.h.b16 %v595
        %v898 = vunpack.c.l.b16 %v596
        %v899 = vunpack.c.l.b16 %v597
        %v900 = vunpack.c.h.b16 %v597
        %v901 = vunpack.c.l.b16 %v598
        %v902 = vunpack.c.h.b16 %v598
        %v903 = vunpack.c.l.b16 %v599
        %v904 = vunpack.c.h.b16 %v599
        %v905 = vunpack.c.l.b16 %v600
        %v906 = vunpack.c.l.b16 %v601
        %v907 = vunpack.c.h.b16 %v601
        %v908 = vunpack.c.l.b16 %v602
        %v909 = vunpack.c.h.b16 %v602
        %v910 = vunpack.c.l.b16 %v603
        %v911 = vunpack.c.h.b16 %v603
        %v912 = vunpack.c.l.b16 %v604
        %v913 = vunpack.c.l.b16 %v605
        %v914 = vunpack.c.h.b16 %v605
        %v915 = vunpack.c.l.b16 %v606
        %v916 = vunpack.c.h.b16 %v606
        %v917 = vunpack.c.l.b16 %v607
        %v918 = vunpack.c.h.b16 %v607
        %v919 = vunpack.c.l.b16 %v608
        %v920 = vunpack.c.l.b16 %v609
        %v921 = vunpack.c.h.b16 %v609
        %v922 = vunpack.c.l.b16 %v610
        %v923 = vunpack.c.h.b16 %v610
        %v924 = vunpack.c.l.b16 %v611
        %v925 = vunpack.c.h.b16 %v611
        %v926 = vunpack.c.l.b16 %v612
        %v927 = vunpack.c.l.b16 %v613
        %v928 = vunpack.c.h.b16 %v613
        %v929 = vunpack.c.l.b16 %v614
        %v930 = vunpack.c.h.b16 %v614
        %v931 = vunpack.c.l.b16 %v615
        %v932 = vunpack.c.h.b16 %v615
        %v933 = vunpack.c.l.b16 %v616
        %v934 = vunpack.c.l.b16 %v617
        %v935 = vunpack.c.h.b16 %v617
        %v936 = vunpack.c.l.b16 %v618
        %v937 = vunpack.c.h.b16 %v618
        %v938 = vunpack.c.l.b16 %v619
        %v939 = vunpack.c.h.b16 %v619
        %v940 = vunpack.c.l.b16 %v620
        %v941 = vunpack.c.l.b16 %v621
        %v942 = vunpack.c.h.b16 %v621
        %v943 = vunpack.c.l.b16 %v622
        %v944 = vunpack.c.h.b16 %v622
        %v945 = vunpack.c.l.b16 %v623
        %v946 = vunpack.c.h.b16 %v623
        %v947 = vunpack.c.l.b16 %v624
        %v948 = vunpack.c.l.b16 %v625
        %v949 = vunpack.c.h.b16 %v625
        %v950 = vunpack.c.l.b16 %v626
        %v951 = vunpack.c.h.b16 %v626
        %v952 = vunpack.c.l.b16 %v627
        %v953 = vunpack.c.h.b16 %v627
        %v954 = vunpack.c.l.b16 %v628
        %v955 = vunpack.c.l.b16 %v629
        %v956 = vunpack.c.h.b16 %v629
        %v957 = vunpack.c.l.b16 %v630
        %v958 = vunpack.c.h.b16 %v630
        %v959 = vunpack.c.l.b16 %v631
        %v960 = vunpack.c.h.b16 %v631
        %v961 = vunpack.c.l.b16 %v632
        %v962 = vunpack.c.l.b16 %v633
        %v963 = vunpack.c.h.b16 %v633
        %v964 = vunpack.c.l.b16 %v634
        %v965 = vunpack.c.h.b16 %v634
        %v966 = vunpack.c.l.b16 %v635
        %v967 = vunpack.c.h.b16 %v635
        %v968 = vunpack.c.l.b16 %v636
        %v969 = vunpack.c.l.b16 %v637
        %v970 = vunpack.c.h.b16 %v637
        %v971 = vunpack.c.l.b16 %v638
        %v972 = vunpack.c.h.b16 %v638
        %v973 = vunpack.c.l.b16 %v639
        %v974 = vunpack.c.h.b16 %v639
        %v975 = vunpack.c.l.b16 %v640
        %v976 = vunpack.c.l.b16 %v641
        %v977 = vunpack.c.h.b16 %v641
        %v978 = vunpack.c.l.b16 %v642
        %v979 = vunpack.c.h.b16 %v642
        %v980 = vunpack.c.l.b16 %v643
        %v981 = vunpack.c.h.b16 %v643
        %v982 = vunpack.c.l.b16 %v644
        %v983 = vunpack.c.l.b16 %v645
        %v984 = vunpack.c.h.b16 %v645
        %v985 = vunpack.c.l.b16 %v646
        %v986 = vunpack.c.h.b16 %v646
        %v987 = vunpack.c.l.b16 %v647
        %v988 = vunpack.c.h.b16 %v647
        %v989 = vunpack.c.l.b16 %v648
        %v990 = vunpack.c.l.b16 %v649
        %v991 = vunpack.c.h.b16 %v649
        %v992 = vunpack.c.l.b16 %v650
        %v993 = vunpack.c.h.b16 %v650
        %v994 = vunpack.c.l.b16 %v651
        %v995 = vunpack.c.h.b16 %v651
        %v996 = vunpack.c.l.b16 %v652
        %v997 = vunpack.c.l.b16 %v653
        %v998 = vunpack.c.h.b16 %v653
        %v999 = vunpack.c.l.b16 %v654
        %v1000 = vunpack.c.h.b16 %v654
        %v1001 = vunpack.c.l.b16 %v655
        %v1002 = vunpack.c.h.b16 %v655
        %v1003 = vunpack.c.l.b16 %v656
        %v1004 = vunpack.c.l.b16 %v657
        %v1005 = vunpack.c.h.b16 %v657
        %v1006 = vunpack.c.l.b16 %v658
        %v1007 = vunpack.c.h.b16 %v658
        %v1008 = vunpack.c.l.b16 %v659
        %v1009 = vunpack.c.h.b16 %v659
        %v1010 = vunpack.c.l.b16 %v660
        %v1011 = vunpack.c.l.b16 %v661
        %v1012 = vunpack.c.h.b16 %v661
        %v1013 = vunpack.c.l.b16 %v662
        %v1014 = vunpack.c.h.b16 %v662
        %v1015 = vunpack.c.l.b16 %v663
        %v1016 = vunpack.c.h.b16 %v663
        %v1017 = vunpack.c.l.b16 %v664
        %v1018 = vunpack.c.l.b16 %v665
        %v1019 = vunpack.c.h.b16 %v665
        %v1020 = vunpack.c.l.b16 %v666
        %v1021 = vunpack.c.h.b16 %v666
        %v1022 = vunpack.c.l.b16 %v667
        %v1023 = vunpack.c.h.b16 %v667
        %v1024 = vunpack.c.l.b16 %v668
        %v1025 = vunpack.c.l.b16 %v669
        %v1026 = vunpack.c.h.b16 %v669
        %v1027 = vunpack.c.l.b16 %v670
        %v1028 = vunpack.c.h.b16 %v670
        %v1029 = vunpack.c.l.b16 %v671
        %v1030 = vunpack.c.h.b16 %v671
        %v1031 = vunpack.c.l.b16 %v672
        %v1032 = vunpack.c.l.b16 %v673
        %v1033 = vunpack.c.h.b16 %v673
        %v1034 = vunpack.c.l.b16 %v674
        %v1035 = vunpack.c.h.b16 %v674
        %v1036 = vunpack.c.l.b16 %v675
        %v1037 = vunpack.c.h.b16 %v675
        %v1038 = vunpack.c.l.b16 %v676
        %v1039 = vunpack.c.l.b16 %v677
        %v1040 = vunpack.c.h.b16 %v677
        %v1041 = vunpack.c.l.b16 %v678
        %v1042 = vunpack.c.h.b16 %v678
        %v1043 = vunpack.c.l.b16 %v679
        %v1044 = vunpack.c.h.b16 %v679
        %v1045 = vunpack.c.l.b16 %v680
        %v1046 = vunpack.c.l.b16 %v681
        %v1047 = vunpack.c.h.b16 %v681
        %v1048 = vunpack.c.l.b16 %v682
        %v1049 = vunpack.c.h.b16 %v682
        %v1050 = vunpack.c.l.b16 %v683
        %v1051 = vunpack.c.h.b16 %v683
        %v1052 = vunpack.c.l.b16 %v684
        %v1053 = vpack.c.b16 %v836, %v829
        %v1054 = vpack.c.b16 %v837, %v830
        %v1055 = vpack.c.b16 %v838, %v831
        %v1056 = vpack.c.b16 %v839, %v832
        %v1057 = vpack.c.b16 %v840, %v833
        %v1058 = vpack.c.b16 %v841, %v834
        %v1059 = vpack.c.b16 %v842, %v835
        %v1060 = vpack.c.b16 %v850, %v843
        %v1061 = vpack.c.b16 %v851, %v844
        %v1062 = vpack.c.b16 %v852, %v845
        %v1063 = vpack.c.b16 %v853, %v846
        %v1064 = vpack.c.b16 %v854, %v847
        %v1065 = vpack.c.b16 %v855, %v848
        %v1066 = vpack.c.b16 %v856, %v849
        %v1067 = vpack.c.b16 %v864, %v857
        %v1068 = vpack.c.b16 %v865, %v858
        %v1069 = vpack.c.b16 %v866, %v859
        %v1070 = vpack.c.b16 %v867, %v860
        %v1071 = vpack.c.b16 %v868, %v861
        %v1072 = vpack.c.b16 %v869, %v862
        %v1073 = vpack.c.b16 %v870, %v863
        %v1074 = vpack.c.b16 %v878, %v871
        %v1075 = vpack.c.b16 %v879, %v872
        %v1076 = vpack.c.b16 %v880, %v873
        %v1077 = vpack.c.b16 %v881, %v874
        %v1078 = vpack.c.b16 %v882, %v875
        %v1079 = vpack.c.b16 %v883, %v876
        %v1080 = vpack.c.b16 %v884, %v877
        %v1081 = vpack.c.b16 %v892, %v885
        %v1082 = vpack.c.b16 %v893, %v886
        %v1083 = vpack.c.b16 %v894, %v887
        %v1084 = vpack.c.b16 %v895, %v888
        %v1085 = vpack.c.b16 %v896, %v889
        %v1086 = vpack.c.b16 %v897, %v890
        %v1087 = vpack.c.b16 %v898, %v891
        %v1088 = vpack.c.b16 %v906, %v899
        %v1089 = vpack.c.b16 %v907, %v900
        %v1090 = vpack.c.b16 %v908, %v901
        %v1091 = vpack.c.b16 %v909, %v902
        %v1092 = vpack.c.b16 %v910, %v903
        %v1093 = vpack.c.b16 %v911, %v904
        %v1094 = vpack.c.b16 %v912, %v905
        %v1095 = vpack.c.b16 %v920, %v913
        %v1096 = vpack.c.b16 %v921, %v914
        %v1097 = vpack.c.b16 %v922, %v915
        %v1098 = vpack.c.b16 %v923, %v916
        %v1099 = vpack.c.b16 %v924, %v917
        %v1100 = vpack.c.b16 %v925, %v918
        %v1101 = vpack.c.b16 %v926, %v919
        %v1102 = vpack.c.b16 %v934, %v927
        %v1103 = vpack.c.b16 %v935, %v928
        %v1104 = vpack.c.b16 %v936, %v929
        %v1105 = vpack.c.b16 %v937, %v930
        %v1106 = vpack.c.b16 %v938, %v931
        %v1107 = vpack.c.b16 %v939, %v932
        %v1108 = vpack.c.b16 %v940, %v933
        %v1109 = vpack.c.b16 %v948, %v941
        %v1110 = vpack.c.b16 %v949, %v942
        %v1111 = vpack.c.b16 %v950, %v943
        %v1112 = vpack.c.b16 %v951, %v944
        %v1113 = vpack.c.b16 %v952, %v945
        %v1114 = vpack.c.b16 %v953, %v946
        %v1115 = vpack.c.b16 %v954, %v947
        %v1116 = vpack.c.b16 %v962, %v955
        %v1117 = vpack.c.b16 %v963, %v956
        %v1118 = vpack.c.b16 %v964, %v957
        %v1119 = vpack.c.b16 %v965, %v958
        %v1120 = vpack.c.b16 %v966, %v959
        %v1121 = vpack.c.b16 %v967, %v960
        %v1122 = vpack.c.b16 %v968, %v961
        %v1123 = vpack.c.b16 %v976, %v969
        %v1124 = vpack.c.b16 %v977, %v970
        %v1125 = vpack.c.b16 %v978, %v971
        %v1126 = vpack.c.b16 %v979, %v972
        %v1127 = vpack.c.b16 %v980, %v973
        %v1128 = vpack.c.b16 %v981, %v974
        %v1129 = vpack.c.b16 %v982, %v975
        %v1130 = vpack.c.b16 %v990, %v983
        %v1131 = vpack.c.b16 %v991, %v984
        %v1132 = vpack.c.b16 %v992, %v985
        %v1133 = vpack.c.b16 %v993, %v986
        %v1134 = vpack.c.b16 %v994, %v987
        %v1135 = vpack.c.b16 %v995, %v988
        %v1136 = vpack.c.b16 %v996, %v989
        %v1137 = vpack.c.b16 %v1004, %v997
        %v1138 = vpack.c.b16 %v1005, %v998
        %v1139 = vpack.c.b16 %v1006, %v999
        %v1140 = vpack.c.b16 %v1007, %v1000
        %v1141 = vpack.c.b16 %v1008, %v1001
        %v1142 = vpack.c.b16 %v1009, %v1002
        %v1143 = vpack.c.b16 %v1010, %v1003
        %v1144 = vpack.c.b16 %v1018, %v1011
        %v1145 = vpack.c.b16 %v1019, %v1012
        %v1146 = vpack.c.b16 %v1020, %v1013
        %v1147 = vpack.c.b16 %v1021, %v1014
        %v1148 = vpack.c.b16 %v1022, %v1015
        %v1149 = vpack.c.b16 %v1023, %v1016
        %v1150 = vpack.c.b16 %v1024, %v1017
        %v1151 = vpack.c.b16 %v1032, %v1025
        %v1152 = vpack.c.b16 %v1033, %v1026
        %v1153 = vpack.c.b16 %v1034, %v1027
        %v1154 = vpack.c.b16 %v1035, %v1028
        %v1155 = vpack.c.b16 %v1036, %v1029
        %v1156 = vpack.c.b16 %v1037, %v1030
        %v1157 = vpack.c.b16 %v1038, %v1031
        %v1158 = vpack.c.b16 %v1046, %v1039
        %v1159 = vpack.c.b16 %v1047, %v1040
        %v1160 = vpack.c.b16 %v1048, %v1041
        %v1161 = vpack.c.b16 %v1049, %v1042
        %v1162 = vpack.c.b16 %v1050, %v1043
        %v1163 = vpack.c.b16 %v1051, %v1044
        %v1164 = vpack.c.b16 %v1052, %v1045
        %1277 = vmatpush.bf16.msra.mxu0 %v1102
        %1278 = vmatpush.bf16.msra.mxu0 %v1095
        %1279 = vmatpush.bf16.msra.mxu0 %v1088
        %1280 = vmatpush.bf16.msra.mxu0 %v1081
        %1281 = vmatpush.bf16.msra.mxu0 %v1074
        %1282 = vmatpush.bf16.msra.mxu0 %v1067
        %1283 = vmatpush.bf16.msra.mxu0 %v1060
        %1284 = vmatpush.bf16.msra.mxu0 %v1053
        %1285 = vmatmul.bf16.gmra.mxu0 %v541
        %v1286 = vpop.f32.mrf.mxu0
        %v1287 = vadd.f32 %v687, %v1286
        %v1288 = vpop.f32.mrf.mxu0
        %v1289 = vadd.f32 %v687, %v1288
        %1290 = vmatmul.bf16.gmra.mxu0 %v543
        %v1291 = vpop.f32.mrf.mxu0
        %v1292 = vadd.f32 %v687, %v1291
        %v1293 = vpop.f32.mrf.mxu0
        %v1294 = vadd.f32 %v687, %v1293
        %1295 = vmatmul.bf16.gmra.mxu0 %v545
        %v1296 = vpop.f32.mrf.mxu0
        %v1297 = vadd.f32 %v687, %v1296
        %v1298 = vpop.f32.mrf.mxu0
        %v1299 = vadd.f32 %v687, %v1298
        %1300 = vmatmul.bf16.gmra.mxu0 %v547
        %v1301 = vpop.f32.mrf.mxu0
        %v1302 = vadd.f32 %v687, %v1301
        %v1303 = vpop.f32.mrf.mxu0
        %v1304 = vadd.f32 %v687, %v1303
        %1305 = vmatmul.bf16.gmra.mxu0 %v549
        %v1306 = vpop.f32.mrf.mxu0
        %v1307 = vadd.f32 %v687, %v1306
        %v1308 = vpop.f32.mrf.mxu0
        %v1309 = vadd.f32 %v687, %v1308
        %1310 = vmatmul.bf16.gmra.mxu0 %v551
        %v1311 = vpop.f32.mrf.mxu0
        %v1312 = vadd.f32 %v687, %v1311
        %v1313 = vpop.f32.mrf.mxu0
        %v1314 = vadd.f32 %v687, %v1313
        %1315 = vmatmul.bf16.gmra.mxu0 %v553
        %v1316 = vpop.f32.mrf.mxu0
        %v1317 = vadd.f32 %v687, %v1316
        %v1318 = vpop.f32.mrf.mxu0
        %v1319 = vadd.f32 %v687, %v1318
        %1320 = vmatmul.bf16.gmra.mxu0 %v555
        %v1321 = vpop.f32.mrf.mxu0
        %v1322 = vadd.f32 %v687, %v1321
        %v1323 = vpop.f32.mrf.mxu0
        %v1324 = vadd.f32 %v687, %v1323
        %1325 = vdwg.mxu0
        %1326 = vmatpush.bf16.msra.mxu0 %v1158
        %1327 = vmatpush.bf16.msra.mxu0 %v1151
        %1328 = vmatpush.bf16.msra.mxu0 %v1144
        %1329 = vmatpush.bf16.msra.mxu0 %v1137
        %1330 = vmatpush.bf16.msra.mxu0 %v1130
        %1331 = vmatpush.bf16.msra.mxu0 %v1123
        %1332 = vmatpush.bf16.msra.mxu0 %v1116
        %1333 = vmatpush.bf16.msra.mxu0 %v1109
        %1334 = vmatmul.bf16.gmra.mxu0 %v542
        %v1335 = vpop.f32.mrf.mxu0
        %v1336 = vadd.f32 %v1287, %v1335
        %v1337 = vpop.f32.mrf.mxu0
        %v1338 = vadd.f32 %v1289, %v1337
        %1339 = vmatmul.bf16.gmra.mxu0 %v544
        %v1340 = vpop.f32.mrf.mxu0
        %v1341 = vadd.f32 %v1292, %v1340
        %v1342 = vpop.f32.mrf.mxu0
        %v1343 = vadd.f32 %v1294, %v1342
        %1344 = vmatmul.bf16.gmra.mxu0 %v546
        %v1345 = vpop.f32.mrf.mxu0
        %v1346 = vadd.f32 %v1297, %v1345
        %v1347 = vpop.f32.mrf.mxu0
        %v1348 = vadd.f32 %v1299, %v1347
        %1349 = vmatmul.bf16.gmra.mxu0 %v548
        %v1350 = vpop.f32.mrf.mxu0
        %v1351 = vadd.f32 %v1302, %v1350
        %v1352 = vpop.f32.mrf.mxu0
        %v1353 = vadd.f32 %v1304, %v1352
        %1354 = vmatmul.bf16.gmra.mxu0 %v550
        %v1355 = vpop.f32.mrf.mxu0
        %v1356 = vadd.f32 %v1307, %v1355
        %v1357 = vpop.f32.mrf.mxu0
        %v1358 = vadd.f32 %v1309, %v1357
        %1359 = vmatmul.bf16.gmra.mxu0 %v552
        %v1360 = vpop.f32.mrf.mxu0
        %v1361 = vadd.f32 %v1312, %v1360
        %v1362 = vpop.f32.mrf.mxu0
        %v1363 = vadd.f32 %v1314, %v1362
        %1364 = vmatmul.bf16.gmra.mxu0 %v554
        %v1365 = vpop.f32.mrf.mxu0
        %v1366 = vadd.f32 %v1317, %v1365
        %v1367 = vpop.f32.mrf.mxu0
        %v1368 = vadd.f32 %v1319, %v1367
        %1369 = vmatmul.bf16.gmra.mxu0 %v556
        %v1370 = vpop.f32.mrf.mxu0
        %v1371 = vadd.f32 %v1322, %v1370
        %v1372 = vpop.f32.mrf.mxu0
        %v1373 = vadd.f32 %v1324, %v1372
        %1374 = vdwg.mxu0
        %1375 = vmatpush.bf16.msra.mxu0 %v1103
        %1376 = vmatpush.bf16.msra.mxu0 %v1096
        %1377 = vmatpush.bf16.msra.mxu0 %v1089
        %1378 = vmatpush.bf16.msra.mxu0 %v1082
        %1379 = vmatpush.bf16.msra.mxu0 %v1075
        %1380 = vmatpush.bf16.msra.mxu0 %v1068
        %1381 = vmatpush.bf16.msra.mxu0 %v1061
        %1382 = vmatpush.bf16.msra.mxu0 %v1054
        %1383 = vmatmul.bf16.gmra.mxu0 %v541
        %v1384 = vpop.f32.mrf.mxu0
        %v1385 = vadd.f32 %v688, %v1384
        %v1386 = vpop.f32.mrf.mxu0
        %v1387 = vadd.f32 %v688, %v1386
        %1388 = vmatmul.bf16.gmra.mxu0 %v543
        %v1389 = vpop.f32.mrf.mxu0
        %v1390 = vadd.f32 %v688, %v1389
        %v1391 = vpop.f32.mrf.mxu0
        %v1392 = vadd.f32 %v688, %v1391
        %1393 = vmatmul.bf16.gmra.mxu0 %v545
        %v1394 = vpop.f32.mrf.mxu0
        %v1395 = vadd.f32 %v688, %v1394
        %v1396 = vpop.f32.mrf.mxu0
        %v1397 = vadd.f32 %v688, %v1396
        %1398 = vmatmul.bf16.gmra.mxu0 %v547
        %v1399 = vpop.f32.mrf.mxu0
        %v1400 = vadd.f32 %v688, %v1399
        %v1401 = vpop.f32.mrf.mxu0
        %v1402 = vadd.f32 %v688, %v1401
        %1403 = vmatmul.bf16.gmra.mxu0 %v549
        %v1404 = vpop.f32.mrf.mxu0
        %v1405 = vadd.f32 %v688, %v1404
        %v1406 = vpop.f32.mrf.mxu0
        %v1407 = vadd.f32 %v688, %v1406
        %1408 = vmatmul.bf16.gmra.mxu0 %v551
        %v1409 = vpop.f32.mrf.mxu0
        %v1410 = vadd.f32 %v688, %v1409
        %v1411 = vpop.f32.mrf.mxu0
        %v1412 = vadd.f32 %v688, %v1411
        %1413 = vmatmul.bf16.gmra.mxu0 %v553
        %v1414 = vpop.f32.mrf.mxu0
        %v1415 = vadd.f32 %v688, %v1414
        %v1416 = vpop.f32.mrf.mxu0
        %v1417 = vadd.f32 %v688, %v1416
        %1418 = vmatmul.bf16.gmra.mxu0 %v555
        %v1419 = vpop.f32.mrf.mxu0
        %v1420 = vadd.f32 %v688, %v1419
        %v1421 = vpop.f32.mrf.mxu0
        %v1422 = vadd.f32 %v688, %v1421
        %1423 = vdwg.mxu0
        %1424 = vmatpush.bf16.msra.mxu0 %v1159
        %1425 = vmatpush.bf16.msra.mxu0 %v1152
        %1426 = vmatpush.bf16.msra.mxu0 %v1145
        %1427 = vmatpush.bf16.msra.mxu0 %v1138
        %1428 = vmatpush.bf16.msra.mxu0 %v1131
        %1429 = vmatpush.bf16.msra.mxu0 %v1124
        %1430 = vmatpush.bf16.msra.mxu0 %v1117
        %1431 = vmatpush.bf16.msra.mxu0 %v1110
        %1432 = vmatmul.bf16.gmra.mxu0 %v542
        %v1433 = vpop.f32.mrf.mxu0
        %v1434 = vadd.f32 %v1385, %v1433
        %v1435 = vpop.f32.mrf.mxu0
        %v1436 = vadd.f32 %v1387, %v1435
        %1437 = vmatmul.bf16.gmra.mxu0 %v544
        %v1438 = vpop.f32.mrf.mxu0
        %v1439 = vadd.f32 %v1390, %v1438
        %v1440 = vpop.f32.mrf.mxu0
        %v1441 = vadd.f32 %v1392, %v1440
        %1442 = vmatmul.bf16.gmra.mxu0 %v546
        %v1443 = vpop.f32.mrf.mxu0
        %v1444 = vadd.f32 %v1395, %v1443
        %v1445 = vpop.f32.mrf.mxu0
        %v1446 = vadd.f32 %v1397, %v1445
        %1447 = vmatmul.bf16.gmra.mxu0 %v548
        %v1448 = vpop.f32.mrf.mxu0
        %v1449 = vadd.f32 %v1400, %v1448
        %v1450 = vpop.f32.mrf.mxu0
        %v1451 = vadd.f32 %v1402, %v1450
        %1452 = vmatmul.bf16.gmra.mxu0 %v550
        %v1453 = vpop.f32.mrf.mxu0
        %v1454 = vadd.f32 %v1405, %v1453
        %v1455 = vpop.f32.mrf.mxu0
        %v1456 = vadd.f32 %v1407, %v1455
        %1457 = vmatmul.bf16.gmra.mxu0 %v552
        %v1458 = vpop.f32.mrf.mxu0
        %v1459 = vadd.f32 %v1410, %v1458
        %v1460 = vpop.f32.mrf.mxu0
        %v1461 = vadd.f32 %v1412, %v1460
        %1462 = vmatmul.bf16.gmra.mxu0 %v554
        %v1463 = vpop.f32.mrf.mxu0
        %v1464 = vadd.f32 %v1415, %v1463
        %v1465 = vpop.f32.mrf.mxu0
        %v1466 = vadd.f32 %v1417, %v1465
        %1467 = vmatmul.bf16.gmra.mxu0 %v556
        %v1468 = vpop.f32.mrf.mxu0
        %v1469 = vadd.f32 %v1420, %v1468
        %v1470 = vpop.f32.mrf.mxu0
        %v1471 = vadd.f32 %v1422, %v1470
        %1472 = vdwg.mxu0
        %1473 = vmatpush.bf16.msra.mxu0 %v1104
        %1474 = vmatpush.bf16.msra.mxu0 %v1097
        %1475 = vmatpush.bf16.msra.mxu0 %v1090
        %1476 = vmatpush.bf16.msra.mxu0 %v1083
        %1477 = vmatpush.bf16.msra.mxu0 %v1076
        %1478 = vmatpush.bf16.msra.mxu0 %v1069
        %1479 = vmatpush.bf16.msra.mxu0 %v1062
        %1480 = vmatpush.bf16.msra.mxu0 %v1055
        %1481 = vmatmul.bf16.gmra.mxu0 %v541
        %v1482 = vpop.f32.mrf.mxu0
        %v1483 = vadd.f32 %v689, %v1482
        %v1484 = vpop.f32.mrf.mxu0
        %v1485 = vadd.f32 %v689, %v1484
        %1486 = vmatmul.bf16.gmra.mxu0 %v543
        %v1487 = vpop.f32.mrf.mxu0
        %v1488 = vadd.f32 %v689, %v1487
        %v1489 = vpop.f32.mrf.mxu0
        %v1490 = vadd.f32 %v689, %v1489
        %1491 = vmatmul.bf16.gmra.mxu0 %v545
        %v1492 = vpop.f32.mrf.mxu0
        %v1493 = vadd.f32 %v689, %v1492
        %v1494 = vpop.f32.mrf.mxu0
        %v1495 = vadd.f32 %v689, %v1494
        %1496 = vmatmul.bf16.gmra.mxu0 %v547
        %v1497 = vpop.f32.mrf.mxu0
        %v1498 = vadd.f32 %v689, %v1497
        %v1499 = vpop.f32.mrf.mxu0
        %v1500 = vadd.f32 %v689, %v1499
        %1501 = vmatmul.bf16.gmra.mxu0 %v549
        %v1502 = vpop.f32.mrf.mxu0
        %v1503 = vadd.f32 %v689, %v1502
        %v1504 = vpop.f32.mrf.mxu0
        %v1505 = vadd.f32 %v689, %v1504
        %1506 = vmatmul.bf16.gmra.mxu0 %v551
        %v1507 = vpop.f32.mrf.mxu0
        %v1508 = vadd.f32 %v689, %v1507
        %v1509 = vpop.f32.mrf.mxu0
        %v1510 = vadd.f32 %v689, %v1509
        %1511 = vmatmul.bf16.gmra.mxu0 %v553
        %v1512 = vpop.f32.mrf.mxu0
        %v1513 = vadd.f32 %v689, %v1512
        %v1514 = vpop.f32.mrf.mxu0
        %v1515 = vadd.f32 %v689, %v1514
        %1516 = vmatmul.bf16.gmra.mxu0 %v555
        %v1517 = vpop.f32.mrf.mxu0
        %v1518 = vadd.f32 %v689, %v1517
        %v1519 = vpop.f32.mrf.mxu0
        %v1520 = vadd.f32 %v689, %v1519
        %1521 = vdwg.mxu0
        %1522 = vmatpush.bf16.msra.mxu0 %v1160
        %1523 = vmatpush.bf16.msra.mxu0 %v1153
        %1524 = vmatpush.bf16.msra.mxu0 %v1146
        %1525 = vmatpush.bf16.msra.mxu0 %v1139
        %1526 = vmatpush.bf16.msra.mxu0 %v1132
        %1527 = vmatpush.bf16.msra.mxu0 %v1125
        %1528 = vmatpush.bf16.msra.mxu0 %v1118
        %1529 = vmatpush.bf16.msra.mxu0 %v1111
        %1530 = vmatmul.bf16.gmra.mxu0 %v542
        %v1531 = vpop.f32.mrf.mxu0
        %v1532 = vadd.f32 %v1483, %v1531
        %v1533 = vpop.f32.mrf.mxu0
        %v1534 = vadd.f32 %v1485, %v1533
        %1535 = vmatmul.bf16.gmra.mxu0 %v544
        %v1536 = vpop.f32.mrf.mxu0
        %v1537 = vadd.f32 %v1488, %v1536
        %v1538 = vpop.f32.mrf.mxu0
        %v1539 = vadd.f32 %v1490, %v1538
        %1540 = vmatmul.bf16.gmra.mxu0 %v546
        %v1541 = vpop.f32.mrf.mxu0
        %v1542 = vadd.f32 %v1493, %v1541
        %v1543 = vpop.f32.mrf.mxu0
        %v1544 = vadd.f32 %v1495, %v1543
        %1545 = vmatmul.bf16.gmra.mxu0 %v548
        %v1546 = vpop.f32.mrf.mxu0
        %v1547 = vadd.f32 %v1498, %v1546
        %v1548 = vpop.f32.mrf.mxu0
        %v1549 = vadd.f32 %v1500, %v1548
        %1550 = vmatmul.bf16.gmra.mxu0 %v550
        %v1551 = vpop.f32.mrf.mxu0
        %v1552 = vadd.f32 %v1503, %v1551
        %v1553 = vpop.f32.mrf.mxu0
        %v1554 = vadd.f32 %v1505, %v1553
        %1555 = vmatmul.bf16.gmra.mxu0 %v552
        %v1556 = vpop.f32.mrf.mxu0
        %v1557 = vadd.f32 %v1508, %v1556
        %v1558 = vpop.f32.mrf.mxu0
        %v1559 = vadd.f32 %v1510, %v1558
        %1560 = vmatmul.bf16.gmra.mxu0 %v554
        %v1561 = vpop.f32.mrf.mxu0
        %v1562 = vadd.f32 %v1513, %v1561
        %v1563 = vpop.f32.mrf.mxu0
        %v1564 = vadd.f32 %v1515, %v1563
        %1565 = vmatmul.bf16.gmra.mxu0 %v556
        %v1566 = vpop.f32.mrf.mxu0
        %v1567 = vadd.f32 %v1518, %v1566
        %v1568 = vpop.f32.mrf.mxu0
        %v1569 = vadd.f32 %v1520, %v1568
        %1570 = vdwg.mxu0
        %1571 = vmatpush.bf16.msra.mxu0 %v1105
        %1572 = vmatpush.bf16.msra.mxu0 %v1098
        %1573 = vmatpush.bf16.msra.mxu0 %v1091
        %1574 = vmatpush.bf16.msra.mxu0 %v1084
        %1575 = vmatpush.bf16.msra.mxu0 %v1077
        %1576 = vmatpush.bf16.msra.mxu0 %v1070
        %1577 = vmatpush.bf16.msra.mxu0 %v1063
        %1578 = vmatpush.bf16.msra.mxu0 %v1056
        %1579 = vmatmul.bf16.gmra.mxu0 %v541
        %v1580 = vpop.f32.mrf.mxu0
        %v1581 = vadd.f32 %v690, %v1580
        %v1582 = vpop.f32.mrf.mxu0
        %v1583 = vadd.f32 %v690, %v1582
        %1584 = vmatmul.bf16.gmra.mxu0 %v543
        %v1585 = vpop.f32.mrf.mxu0
        %v1586 = vadd.f32 %v690, %v1585
        %v1587 = vpop.f32.mrf.mxu0
        %v1588 = vadd.f32 %v690, %v1587
        %1589 = vmatmul.bf16.gmra.mxu0 %v545
        %v1590 = vpop.f32.mrf.mxu0
        %v1591 = vadd.f32 %v690, %v1590
        %v1592 = vpop.f32.mrf.mxu0
        %v1593 = vadd.f32 %v690, %v1592
        %1594 = vmatmul.bf16.gmra.mxu0 %v547
        %v1595 = vpop.f32.mrf.mxu0
        %v1596 = vadd.f32 %v690, %v1595
        %v1597 = vpop.f32.mrf.mxu0
        %v1598 = vadd.f32 %v690, %v1597
        %1599 = vmatmul.bf16.gmra.mxu0 %v549
        %v1600 = vpop.f32.mrf.mxu0
        %v1601 = vadd.f32 %v690, %v1600
        %v1602 = vpop.f32.mrf.mxu0
        %v1603 = vadd.f32 %v690, %v1602
        %1604 = vmatmul.bf16.gmra.mxu0 %v551
        %v1605 = vpop.f32.mrf.mxu0
        %v1606 = vadd.f32 %v690, %v1605
        %v1607 = vpop.f32.mrf.mxu0
        %v1608 = vadd.f32 %v690, %v1607
        %1609 = vmatmul.bf16.gmra.mxu0 %v553
        %v1610 = vpop.f32.mrf.mxu0
        %v1611 = vadd.f32 %v690, %v1610
        %v1612 = vpop.f32.mrf.mxu0
        %v1613 = vadd.f32 %v690, %v1612
        %1614 = vmatmul.bf16.gmra.mxu0 %v555
        %v1615 = vpop.f32.mrf.mxu0
        %v1616 = vadd.f32 %v690, %v1615
        %v1617 = vpop.f32.mrf.mxu0
        %v1618 = vadd.f32 %v690, %v1617
        %1619 = vdwg.mxu0
        %1620 = vmatpush.bf16.msra.mxu0 %v1161
        %1621 = vmatpush.bf16.msra.mxu0 %v1154
        %1622 = vmatpush.bf16.msra.mxu0 %v1147
        %1623 = vmatpush.bf16.msra.mxu0 %v1140
        %1624 = vmatpush.bf16.msra.mxu0 %v1133
        %1625 = vmatpush.bf16.msra.mxu0 %v1126
        %1626 = vmatpush.bf16.msra.mxu0 %v1119
        %1627 = vmatpush.bf16.msra.mxu0 %v1112
        %1628 = vmatmul.bf16.gmra.mxu0 %v542
        %v1629 = vpop.f32.mrf.mxu0
        %v1630 = vadd.f32 %v1581, %v1629
        %v1631 = vpop.f32.mrf.mxu0
        %v1632 = vadd.f32 %v1583, %v1631
        %1633 = vmatmul.bf16.gmra.mxu0 %v544
        %v1634 = vpop.f32.mrf.mxu0
        %v1635 = vadd.f32 %v1586, %v1634
        %v1636 = vpop.f32.mrf.mxu0
        %v1637 = vadd.f32 %v1588, %v1636
        %1638 = vmatmul.bf16.gmra.mxu0 %v546
        %v1639 = vpop.f32.mrf.mxu0
        %v1640 = vadd.f32 %v1591, %v1639
        %v1641 = vpop.f32.mrf.mxu0
        %v1642 = vadd.f32 %v1593, %v1641
        %1643 = vmatmul.bf16.gmra.mxu0 %v548
        %v1644 = vpop.f32.mrf.mxu0
        %v1645 = vadd.f32 %v1596, %v1644
        %v1646 = vpop.f32.mrf.mxu0
        %v1647 = vadd.f32 %v1598, %v1646
        %1648 = vmatmul.bf16.gmra.mxu0 %v550
        %v1649 = vpop.f32.mrf.mxu0
        %v1650 = vadd.f32 %v1601, %v1649
        %v1651 = vpop.f32.mrf.mxu0
        %v1652 = vadd.f32 %v1603, %v1651
        %1653 = vmatmul.bf16.gmra.mxu0 %v552
        %v1654 = vpop.f32.mrf.mxu0
        %v1655 = vadd.f32 %v1606, %v1654
        %v1656 = vpop.f32.mrf.mxu0
        %v1657 = vadd.f32 %v1608, %v1656
        %1658 = vmatmul.bf16.gmra.mxu0 %v554
        %v1659 = vpop.f32.mrf.mxu0
        %v1660 = vadd.f32 %v1611, %v1659
        %v1661 = vpop.f32.mrf.mxu0
        %v1662 = vadd.f32 %v1613, %v1661
        %1663 = vmatmul.bf16.gmra.mxu0 %v556
        %v1664 = vpop.f32.mrf.mxu0
        %v1665 = vadd.f32 %v1616, %v1664
        %v1666 = vpop.f32.mrf.mxu0
        %v1667 = vadd.f32 %v1618, %v1666
        %1668 = vdwg.mxu0
        %1669 = vmatpush.bf16.msra.mxu0 %v1106
        %1670 = vmatpush.bf16.msra.mxu0 %v1099
        %1671 = vmatpush.bf16.msra.mxu0 %v1092
        %1672 = vmatpush.bf16.msra.mxu0 %v1085
        %1673 = vmatpush.bf16.msra.mxu0 %v1078
        %1674 = vmatpush.bf16.msra.mxu0 %v1071
        %1675 = vmatpush.bf16.msra.mxu0 %v1064
        %1676 = vmatpush.bf16.msra.mxu0 %v1057
        %1677 = vmatmul.bf16.gmra.mxu0 %v541
        %v1678 = vpop.f32.mrf.mxu0
        %v1679 = vadd.f32 %v691, %v1678
        %v1680 = vpop.f32.mrf.mxu0
        %v1681 = vadd.f32 %v691, %v1680
        %1682 = vmatmul.bf16.gmra.mxu0 %v543
        %v1683 = vpop.f32.mrf.mxu0
        %v1684 = vadd.f32 %v691, %v1683
        %v1685 = vpop.f32.mrf.mxu0
        %v1686 = vadd.f32 %v691, %v1685
        %1687 = vmatmul.bf16.gmra.mxu0 %v545
        %v1688 = vpop.f32.mrf.mxu0
        %v1689 = vadd.f32 %v691, %v1688
        %v1690 = vpop.f32.mrf.mxu0
        %v1691 = vadd.f32 %v691, %v1690
        %1692 = vmatmul.bf16.gmra.mxu0 %v547
        %v1693 = vpop.f32.mrf.mxu0
        %v1694 = vadd.f32 %v691, %v1693
        %v1695 = vpop.f32.mrf.mxu0
        %v1696 = vadd.f32 %v691, %v1695
        %1697 = vmatmul.bf16.gmra.mxu0 %v549
        %v1698 = vpop.f32.mrf.mxu0
        %v1699 = vadd.f32 %v691, %v1698
        %v1700 = vpop.f32.mrf.mxu0
        %v1701 = vadd.f32 %v691, %v1700
        %1702 = vmatmul.bf16.gmra.mxu0 %v551
        %v1703 = vpop.f32.mrf.mxu0
        %v1704 = vadd.f32 %v691, %v1703
        %v1705 = vpop.f32.mrf.mxu0
        %v1706 = vadd.f32 %v691, %v1705
        %1707 = vmatmul.bf16.gmra.mxu0 %v553
        %v1708 = vpop.f32.mrf.mxu0
        %v1709 = vadd.f32 %v691, %v1708
        %v1710 = vpop.f32.mrf.mxu0
        %v1711 = vadd.f32 %v691, %v1710
        %1712 = vmatmul.bf16.gmra.mxu0 %v555
        %v1713 = vpop.f32.mrf.mxu0
        %v1714 = vadd.f32 %v691, %v1713
        %v1715 = vpop.f32.mrf.mxu0
        %v1716 = vadd.f32 %v691, %v1715
        %1717 = vdwg.mxu0
        %1718 = vmatpush.bf16.msra.mxu0 %v1162
        %1719 = vmatpush.bf16.msra.mxu0 %v1155
        %1720 = vmatpush.bf16.msra.mxu0 %v1148
        %1721 = vmatpush.bf16.msra.mxu0 %v1141
        %1722 = vmatpush.bf16.msra.mxu0 %v1134
        %1723 = vmatpush.bf16.msra.mxu0 %v1127
        %1724 = vmatpush.bf16.msra.mxu0 %v1120
        %1725 = vmatpush.bf16.msra.mxu0 %v1113
        %1726 = vmatmul.bf16.gmra.mxu0 %v542
        %v1727 = vpop.f32.mrf.mxu0
        %v1728 = vadd.f32 %v1679, %v1727
        %v1729 = vpop.f32.mrf.mxu0
        %v1730 = vadd.f32 %v1681, %v1729
        %1731 = vmatmul.bf16.gmra.mxu0 %v544
        %v1732 = vpop.f32.mrf.mxu0
        %v1733 = vadd.f32 %v1684, %v1732
        %v1734 = vpop.f32.mrf.mxu0
        %v1735 = vadd.f32 %v1686, %v1734
        %1736 = vmatmul.bf16.gmra.mxu0 %v546
        %v1737 = vpop.f32.mrf.mxu0
        %v1738 = vadd.f32 %v1689, %v1737
        %v1739 = vpop.f32.mrf.mxu0
        %v1740 = vadd.f32 %v1691, %v1739
        %1741 = vmatmul.bf16.gmra.mxu0 %v548
        %v1742 = vpop.f32.mrf.mxu0
        %v1743 = vadd.f32 %v1694, %v1742
        %v1744 = vpop.f32.mrf.mxu0
        %v1745 = vadd.f32 %v1696, %v1744
        %1746 = vmatmul.bf16.gmra.mxu0 %v550
        %v1747 = vpop.f32.mrf.mxu0
        %v1748 = vadd.f32 %v1699, %v1747
        %v1749 = vpop.f32.mrf.mxu0
        %v1750 = vadd.f32 %v1701, %v1749
        %1751 = vmatmul.bf16.gmra.mxu0 %v552
        %v1752 = vpop.f32.mrf.mxu0
        %v1753 = vadd.f32 %v1704, %v1752
        %v1754 = vpop.f32.mrf.mxu0
        %v1755 = vadd.f32 %v1706, %v1754
        %1756 = vmatmul.bf16.gmra.mxu0 %v554
        %v1757 = vpop.f32.mrf.mxu0
        %v1758 = vadd.f32 %v1709, %v1757
        %v1759 = vpop.f32.mrf.mxu0
        %v1760 = vadd.f32 %v1711, %v1759
        %1761 = vmatmul.bf16.gmra.mxu0 %v556
        %v1762 = vpop.f32.mrf.mxu0
        %v1763 = vadd.f32 %v1714, %v1762
        %v1764 = vpop.f32.mrf.mxu0
        %v1765 = vadd.f32 %v1716, %v1764
        %1766 = vdwg.mxu0
        %1767 = vmatpush.bf16.msra.mxu0 %v1107
        %1768 = vmatpush.bf16.msra.mxu0 %v1100
        %1769 = vmatpush.bf16.msra.mxu0 %v1093
        %1770 = vmatpush.bf16.msra.mxu0 %v1086
        %1771 = vmatpush.bf16.msra.mxu0 %v1079
        %1772 = vmatpush.bf16.msra.mxu0 %v1072
        %1773 = vmatpush.bf16.msra.mxu0 %v1065
        %1774 = vmatpush.bf16.msra.mxu0 %v1058
        %1775 = vmatmul.bf16.gmra.mxu0 %v541
        %v1776 = vpop.f32.mrf.mxu0
        %v1777 = vadd.f32 %v692, %v1776
        %v1778 = vpop.f32.mrf.mxu0
        %v1779 = vadd.f32 %v692, %v1778
        %1780 = vmatmul.bf16.gmra.mxu0 %v543
        %v1781 = vpop.f32.mrf.mxu0
        %v1782 = vadd.f32 %v692, %v1781
        %v1783 = vpop.f32.mrf.mxu0
        %v1784 = vadd.f32 %v692, %v1783
        %1785 = vmatmul.bf16.gmra.mxu0 %v545
        %v1786 = vpop.f32.mrf.mxu0
        %v1787 = vadd.f32 %v692, %v1786
        %v1788 = vpop.f32.mrf.mxu0
        %v1789 = vadd.f32 %v692, %v1788
        %1790 = vmatmul.bf16.gmra.mxu0 %v547
        %v1791 = vpop.f32.mrf.mxu0
        %v1792 = vadd.f32 %v692, %v1791
        %v1793 = vpop.f32.mrf.mxu0
        %v1794 = vadd.f32 %v692, %v1793
        %1795 = vmatmul.bf16.gmra.mxu0 %v549
        %v1796 = vpop.f32.mrf.mxu0
        %v1797 = vadd.f32 %v692, %v1796
        %v1798 = vpop.f32.mrf.mxu0
        %v1799 = vadd.f32 %v692, %v1798
        %1800 = vmatmul.bf16.gmra.mxu0 %v551
        %v1801 = vpop.f32.mrf.mxu0
        %v1802 = vadd.f32 %v692, %v1801
        %v1803 = vpop.f32.mrf.mxu0
        %v1804 = vadd.f32 %v692, %v1803
        %1805 = vmatmul.bf16.gmra.mxu0 %v553
        %v1806 = vpop.f32.mrf.mxu0
        %v1807 = vadd.f32 %v692, %v1806
        %v1808 = vpop.f32.mrf.mxu0
        %v1809 = vadd.f32 %v692, %v1808
        %1810 = vmatmul.bf16.gmra.mxu0 %v555
        %v1811 = vpop.f32.mrf.mxu0
        %v1812 = vadd.f32 %v692, %v1811
        %v1813 = vpop.f32.mrf.mxu0
        %v1814 = vadd.f32 %v692, %v1813
        %1815 = vdwg.mxu0
        %1816 = vmatpush.bf16.msra.mxu0 %v1163
        %1817 = vmatpush.bf16.msra.mxu0 %v1156
        %1818 = vmatpush.bf16.msra.mxu0 %v1149
        %1819 = vmatpush.bf16.msra.mxu0 %v1142
        %1820 = vmatpush.bf16.msra.mxu0 %v1135
        %1821 = vmatpush.bf16.msra.mxu0 %v1128
        %1822 = vmatpush.bf16.msra.mxu0 %v1121
        %1823 = vmatpush.bf16.msra.mxu0 %v1114
        %1824 = vmatmul.bf16.gmra.mxu0 %v542
        %v1825 = vpop.f32.mrf.mxu0
        %v1826 = vadd.f32 %v1777, %v1825
        %v1827 = vpop.f32.mrf.mxu0
        %v1828 = vadd.f32 %v1779, %v1827
        %1829 = vmatmul.bf16.gmra.mxu0 %v544
        %v1830 = vpop.f32.mrf.mxu0
        %v1831 = vadd.f32 %v1782, %v1830
        %v1832 = vpop.f32.mrf.mxu0
        %v1833 = vadd.f32 %v1784, %v1832
        %1834 = vmatmul.bf16.gmra.mxu0 %v546
        %v1835 = vpop.f32.mrf.mxu0
        %v1836 = vadd.f32 %v1787, %v1835
        %v1837 = vpop.f32.mrf.mxu0
        %v1838 = vadd.f32 %v1789, %v1837
        %1839 = vmatmul.bf16.gmra.mxu0 %v548
        %v1840 = vpop.f32.mrf.mxu0
        %v1841 = vadd.f32 %v1792, %v1840
        %v1842 = vpop.f32.mrf.mxu0
        %v1843 = vadd.f32 %v1794, %v1842
        %1844 = vmatmul.bf16.gmra.mxu0 %v550
        %v1845 = vpop.f32.mrf.mxu0
        %v1846 = vadd.f32 %v1797, %v1845
        %v1847 = vpop.f32.mrf.mxu0
        %v1848 = vadd.f32 %v1799, %v1847
        %1849 = vmatmul.bf16.gmra.mxu0 %v552
        %v1850 = vpop.f32.mrf.mxu0
        %v1851 = vadd.f32 %v1802, %v1850
        %v1852 = vpop.f32.mrf.mxu0
        %v1853 = vadd.f32 %v1804, %v1852
        %1854 = vmatmul.bf16.gmra.mxu0 %v554
        %v1855 = vpop.f32.mrf.mxu0
        %v1856 = vadd.f32 %v1807, %v1855
        %v1857 = vpop.f32.mrf.mxu0
        %v1858 = vadd.f32 %v1809, %v1857
        %1859 = vmatmul.bf16.gmra.mxu0 %v556
        %v1860 = vpop.f32.mrf.mxu0
        %v1861 = vadd.f32 %v1812, %v1860
        %v1862 = vpop.f32.mrf.mxu0
        %v1863 = vadd.f32 %v1814, %v1862
        %1864 = vdwg.mxu0
        %1865 = vmatpush.bf16.msra.mxu0 %v1108
        %1866 = vmatpush.bf16.msra.mxu0 %v1101
        %1867 = vmatpush.bf16.msra.mxu0 %v1094
        %1868 = vmatpush.bf16.msra.mxu0 %v1087
        %1869 = vmatpush.bf16.msra.mxu0 %v1080
        %1870 = vmatpush.bf16.msra.mxu0 %v1073
        %1871 = vmatpush.bf16.msra.mxu0 %v1066
        %1872 = vmatpush.bf16.msra.mxu0 %v1059
        %1873 = vmatmul.bf16.gmra.mxu0 %v541
        %v1874 = vpop.f32.mrf.mxu0
        %v1875 = vadd.f32 %v693, %v1874
        %v1876 = vpop.f32.mrf.mxu0
        %v1877 = vadd.f32 %v693, %v1876
        %1878 = vmatmul.bf16.gmra.mxu0 %v543
        %v1879 = vpop.f32.mrf.mxu0
        %v1880 = vadd.f32 %v693, %v1879
        %v1881 = vpop.f32.mrf.mxu0
        %v1882 = vadd.f32 %v693, %v1881
        %1883 = vmatmul.bf16.gmra.mxu0 %v545
        %v1884 = vpop.f32.mrf.mxu0
        %v1885 = vadd.f32 %v693, %v1884
        %v1886 = vpop.f32.mrf.mxu0
        %v1887 = vadd.f32 %v693, %v1886
        %1888 = vmatmul.bf16.gmra.mxu0 %v547
        %v1889 = vpop.f32.mrf.mxu0
        %v1890 = vadd.f32 %v693, %v1889
        %v1891 = vpop.f32.mrf.mxu0
        %v1892 = vadd.f32 %v693, %v1891
        %1893 = vmatmul.bf16.gmra.mxu0 %v549
        %v1894 = vpop.f32.mrf.mxu0
        %v1895 = vadd.f32 %v693, %v1894
        %v1896 = vpop.f32.mrf.mxu0
        %v1897 = vadd.f32 %v693, %v1896
        %1898 = vmatmul.bf16.gmra.mxu0 %v551
        %v1899 = vpop.f32.mrf.mxu0
        %v1900 = vadd.f32 %v693, %v1899
        %v1901 = vpop.f32.mrf.mxu0
        %v1902 = vadd.f32 %v693, %v1901
        %1903 = vmatmul.bf16.gmra.mxu0 %v553
        %v1904 = vpop.f32.mrf.mxu0
        %v1905 = vadd.f32 %v693, %v1904
        %v1906 = vpop.f32.mrf.mxu0
        %v1907 = vadd.f32 %v693, %v1906
        %1908 = vmatmul.bf16.gmra.mxu0 %v555
        %v1909 = vpop.f32.mrf.mxu0
        %v1910 = vadd.f32 %v693, %v1909
        %v1911 = vpop.f32.mrf.mxu0
        %v1912 = vadd.f32 %v693, %v1911
        %1913 = vdwg.mxu0
        %1914 = vmatpush.bf16.msra.mxu0 %v1164
        %1915 = vmatpush.bf16.msra.mxu0 %v1157
        %1916 = vmatpush.bf16.msra.mxu0 %v1150
        %1917 = vmatpush.bf16.msra.mxu0 %v1143
        %1918 = vmatpush.bf16.msra.mxu0 %v1136
        %1919 = vmatpush.bf16.msra.mxu0 %v1129
        %1920 = vmatpush.bf16.msra.mxu0 %v1122
        %1921 = vmatpush.bf16.msra.mxu0 %v1115
        %1922 = vmatmul.bf16.gmra.mxu0 %v542
        %v1923 = vpop.f32.mrf.mxu0
        %v1924 = vadd.f32 %v1875, %v1923
        %v1925 = vpop.f32.mrf.mxu0
        %v1926 = vadd.f32 %v1877, %v1925
        %1927 = vmatmul.bf16.gmra.mxu0 %v544
        %v1928 = vpop.f32.mrf.mxu0
        %v1929 = vadd.f32 %v1880, %v1928
        %v1930 = vpop.f32.mrf.mxu0
        %v1931 = vadd.f32 %v1882, %v1930
        %1932 = vmatmul.bf16.gmra.mxu0 %v546
        %v1933 = vpop.f32.mrf.mxu0
        %v1934 = vadd.f32 %v1885, %v1933
        %v1935 = vpop.f32.mrf.mxu0
        %v1936 = vadd.f32 %v1887, %v1935
        %1937 = vmatmul.bf16.gmra.mxu0 %v548
        %v1938 = vpop.f32.mrf.mxu0
        %v1939 = vadd.f32 %v1890, %v1938
        %v1940 = vpop.f32.mrf.mxu0
        %v1941 = vadd.f32 %v1892, %v1940
        %1942 = vmatmul.bf16.gmra.mxu0 %v550
        %v1943 = vpop.f32.mrf.mxu0
        %v1944 = vadd.f32 %v1895, %v1943
        %v1945 = vpop.f32.mrf.mxu0
        %v1946 = vadd.f32 %v1897, %v1945
        %1947 = vmatmul.bf16.gmra.mxu0 %v552
        %v1948 = vpop.f32.mrf.mxu0
        %v1949 = vadd.f32 %v1900, %v1948
        %v1950 = vpop.f32.mrf.mxu0
        %v1951 = vadd.f32 %v1902, %v1950
        %1952 = vmatmul.bf16.gmra.mxu0 %v554
        %v1953 = vpop.f32.mrf.mxu0
        %v1954 = vadd.f32 %v1905, %v1953
        %v1955 = vpop.f32.mrf.mxu0
        %v1956 = vadd.f32 %v1907, %v1955
        %1957 = vmatmul.bf16.gmra.mxu0 %v556
        %v1958 = vpop.f32.mrf.mxu0
        %v1959 = vadd.f32 %v1910, %v1958
        %v1960 = vpop.f32.mrf.mxu0
        %v1961 = vadd.f32 %v1912, %v1960
        %1962 = vdwg.mxu0
        %v1963 = vtanh.pop %v1336
        %v1964 = vtanh.pop %v1434
        %v1965 = vtanh.pop %v1532
        %v1966 = vtanh.pop %v1630
        %v1967 = vtanh.pop %v1728
        %v1968 = vtanh.pop %v1826
        %v1969 = vtanh.pop %v1924
        %v1970 = vtanh.pop %v1338
        %v1971 = vtanh.pop %v1436
        %v1972 = vtanh.pop %v1534
        %v1973 = vtanh.pop %v1632
        %v1974 = vtanh.pop %v1730
        %v1975 = vtanh.pop %v1828
        %v1976 = vtanh.pop %v1926
        %v1977 = vtanh.pop %v1341
        %v1978 = vtanh.pop %v1439
        %v1979 = vtanh.pop %v1537
        %v1980 = vtanh.pop %v1635
        %v1981 = vtanh.pop %v1733
        %v1982 = vtanh.pop %v1831
        %v1983 = vtanh.pop %v1929
        %v1984 = vtanh.pop %v1343
        %v1985 = vtanh.pop %v1441
        %v1986 = vtanh.pop %v1539
        %v1987 = vtanh.pop %v1637
        %v1988 = vtanh.pop %v1735
        %v1989 = vtanh.pop %v1833
        %v1990 = vtanh.pop %v1931
        %v1991 = vtanh.pop %v1346
        %v1992 = vtanh.pop %v1444
        %v1993 = vtanh.pop %v1542
        %v1994 = vtanh.pop %v1640
        %v1995 = vtanh.pop %v1738
        %v1996 = vtanh.pop %v1836
        %v1997 = vtanh.pop %v1934
        %v1998 = vtanh.pop %v1348
        %v1999 = vtanh.pop %v1446
        %v2000 = vtanh.pop %v1544
        %v2001 = vtanh.pop %v1642
        %v2002 = vtanh.pop %v1740
        %v2003 = vtanh.pop %v1838
        %v2004 = vtanh.pop %v1936
        %v2005 = vtanh.pop %v1351
        %v2006 = vtanh.pop %v1449
        %v2007 = vtanh.pop %v1547
        %v2008 = vtanh.pop %v1645
        %v2009 = vtanh.pop %v1743
        %v2010 = vtanh.pop %v1841
        %v2011 = vtanh.pop %v1939
        %v2012 = vtanh.pop %v1353
        %v2013 = vtanh.pop %v1451
        %v2014 = vtanh.pop %v1549
        %v2015 = vtanh.pop %v1647
        %v2016 = vtanh.pop %v1745
        %v2017 = vtanh.pop %v1843
        %v2018 = vtanh.pop %v1941
        %v2019 = vtanh.pop %v1356
        %v2020 = vtanh.pop %v1454
        %v2021 = vtanh.pop %v1552
        %v2022 = vtanh.pop %v1650
        %v2023 = vtanh.pop %v1748
        %v2024 = vtanh.pop %v1846
        %v2025 = vtanh.pop %v1944
        %v2026 = vtanh.pop %v1358
        %v2027 = vtanh.pop %v1456
        %v2028 = vtanh.pop %v1554
        %v2029 = vtanh.pop %v1652
        %v2030 = vtanh.pop %v1750
        %v2031 = vtanh.pop %v1848
        %v2032 = vtanh.pop %v1946
        %v2033 = vtanh.pop %v1361
        %v2034 = vtanh.pop %v1459
        %v2035 = vtanh.pop %v1557
        %v2036 = vtanh.pop %v1655
        %v2037 = vtanh.pop %v1753
        %v2038 = vtanh.pop %v1851
        %v2039 = vtanh.pop %v1949
        %v2040 = vtanh.pop %v1363
        %v2041 = vtanh.pop %v1461
        %v2042 = vtanh.pop %v1559
        %v2043 = vtanh.pop %v1657
        %v2044 = vtanh.pop %v1755
        %v2045 = vtanh.pop %v1853
        %v2046 = vtanh.pop %v1951
        %v2047 = vtanh.pop %v1366
        %v2048 = vtanh.pop %v1464
        %v2049 = vtanh.pop %v1562
        %v2050 = vtanh.pop %v1660
        %v2051 = vtanh.pop %v1758
        %v2052 = vtanh.pop %v1856
        %v2053 = vtanh.pop %v1954
        %v2054 = vtanh.pop %v1368
        %v2055 = vtanh.pop %v1466
        %v2056 = vtanh.pop %v1564
        %v2057 = vtanh.pop %v1662
        %v2058 = vtanh.pop %v1760
        %v2059 = vtanh.pop %v1858
        %v2060 = vtanh.pop %v1956
        %v2061 = vtanh.pop %v1371
        %v2062 = vtanh.pop %v1469
        %v2063 = vtanh.pop %v1567
        %v2064 = vtanh.pop %v1665
        %v2065 = vtanh.pop %v1763
        %v2066 = vtanh.pop %v1861
        %v2067 = vtanh.pop %v1959
        %v2068 = vtanh.pop %v1373
        %v2069 = vtanh.pop %v1471
        %v2070 = vtanh.pop %v1569
        %v2071 = vtanh.pop %v1667
        %v2072 = vtanh.pop %v1765
        %v2073 = vtanh.pop %v1863
        %v2074 = vtanh.pop %v1961
        %2075 = vst [vmem:[%s235] sm:$0xff] %v1963
        %2076 = vst [vmem:[%s235 + $0x8] sm:$0xff] %v1964
        %2077 = vst [vmem:[%s235 + $0x10] sm:$0xff] %v1965
        %2078 = vst [vmem:[%s235 + $0x18] sm:$0xff] %v1966
        %2079 = vst [vmem:[%s235 + $0x20] sm:$0xff] %v1967
        %2080 = vst [vmem:[%s235 + $0x28] sm:$0xff] %v1968
        %2081 = vst [vmem:[%s235 + $0x30] sm:$0xff] %v1969
        %2082 = vst [vmem:[%s235 + $0x38] sm:$0xff] %v1970
        %2083 = vst [vmem:[%s235 + $0x40] sm:$0xff] %v1971
        %2084 = vst [vmem:[%s235 + $0x48] sm:$0xff] %v1972
        %2085 = vst [vmem:[%s235 + $0x50] sm:$0xff] %v1973
        %2086 = vst [vmem:[%s235 + $0x58] sm:$0xff] %v1974
        %2087 = vst [vmem:[%s235 + $0x60] sm:$0xff] %v1975
        %2088 = vst [vmem:[%s235 + $0x68] sm:$0xff] %v1976
        %2089 = vst [vmem:[%s235 + $0x70] sm:$0xff] %v1977
        %2090 = vst [vmem:[%s235 + $0x78] sm:$0xff] %v1978
        %2091 = vst [vmem:[%s235 + $0x80] sm:$0xff] %v1979
        %2092 = vst [vmem:[%s235 + $0x88] sm:$0xff] %v1980
        %2093 = vst [vmem:[%s235 + $0x90] sm:$0xff] %v1981
        %2094 = vst [vmem:[%s235 + $0x98] sm:$0xff] %v1982
        %2095 = vst [vmem:[%s235 + $0xa0] sm:$0xff] %v1983
        %2096 = vst [vmem:[%s235 + $0xa8] sm:$0xff] %v1984
        %2097 = vst [vmem:[%s235 + $0xb0] sm:$0xff] %v1985
        %2098 = vst [vmem:[%s235 + $0xb8] sm:$0xff] %v1986
        %2099 = vst [vmem:[%s235 + $0xc0] sm:$0xff] %v1987
        %2100 = vst [vmem:[%s235 + $0xc8] sm:$0xff] %v1988
        %2101 = vst [vmem:[%s235 + $0xd0] sm:$0xff] %v1989
        %2102 = vst [vmem:[%s235 + $0xd8] sm:$0xff] %v1990
        %2103 = vst [vmem:[%s235 + $0xe0] sm:$0xff] %v1991
        %2104 = vst [vmem:[%s235 + $0xe8] sm:$0xff] %v1992
        %2105 = vst [vmem:[%s235 + $0xf0] sm:$0xff] %v1993
        %2106 = vst [vmem:[%s235 + $0xf8] sm:$0xff] %v1994
        %2107 = vst [vmem:[%s235 + $0x100] sm:$0xff] %v1995
        %2108 = vst [vmem:[%s235 + $0x108] sm:$0xff] %v1996
        %2109 = vst [vmem:[%s235 + $0x110] sm:$0xff] %v1997
        %2110 = vst [vmem:[%s235 + $0x118] sm:$0xff] %v1998
        %2111 = vst [vmem:[%s235 + $0x120] sm:$0xff] %v1999
        %2112 = vst [vmem:[%s235 + $0x128] sm:$0xff] %v2000
        %2113 = vst [vmem:[%s235 + $0x130] sm:$0xff] %v2001
        %2114 = vst [vmem:[%s235 + $0x138] sm:$0xff] %v2002
        %2115 = vst [vmem:[%s235 + $0x140] sm:$0xff] %v2003
        %2116 = vst [vmem:[%s235 + $0x148] sm:$0xff] %v2004
        %2117 = vst [vmem:[%s235 + $0x150] sm:$0xff] %v2005
        %2118 = vst [vmem:[%s235 + $0x158] sm:$0xff] %v2006
        %2119 = vst [vmem:[%s235 + $0x160] sm:$0xff] %v2007
        %2120 = vst [vmem:[%s235 + $0x168] sm:$0xff] %v2008
        %2121 = vst [vmem:[%s235 + $0x170] sm:$0xff] %v2009
        %2122 = vst [vmem:[%s235 + $0x178] sm:$0xff] %v2010
        %2123 = vst [vmem:[%s235 + $0x180] sm:$0xff] %v2011
        %2124 = vst [vmem:[%s235 + $0x188] sm:$0xff] %v2012
        %2125 = vst [vmem:[%s235 + $0x190] sm:$0xff] %v2013
        %2126 = vst [vmem:[%s235 + $0x198] sm:$0xff] %v2014
        %2127 = vst [vmem:[%s235 + $0x1a0] sm:$0xff] %v2015
        %2128 = vst [vmem:[%s235 + $0x1a8] sm:$0xff] %v2016
        %2129 = vst [vmem:[%s235 + $0x1b0] sm:$0xff] %v2017
        %2130 = vst [vmem:[%s235 + $0x1b8] sm:$0xff] %v2018
        %2131 = vst [vmem:[%s235 + $0x1c0] sm:$0xff] %v2019
        %2132 = vst [vmem:[%s235 + $0x1c8] sm:$0xff] %v2020
        %2133 = vst [vmem:[%s235 + $0x1d0] sm:$0xff] %v2021
        %2134 = vst [vmem:[%s235 + $0x1d8] sm:$0xff] %v2022
        %2135 = vst [vmem:[%s235 + $0x1e0] sm:$0xff] %v2023
        %2136 = vst [vmem:[%s235 + $0x1e8] sm:$0xff] %v2024
        %2137 = vst [vmem:[%s235 + $0x1f0] sm:$0xff] %v2025
        %2138 = vst [vmem:[%s235 + $0x1f8] sm:$0xff] %v2026
        %2139 = vst [vmem:[%s235 + $0x200] sm:$0xff] %v2027
        %2140 = vst [vmem:[%s235 + $0x208] sm:$0xff] %v2028
        %2141 = vst [vmem:[%s235 + $0x210] sm:$0xff] %v2029
        %2142 = vst [vmem:[%s235 + $0x218] sm:$0xff] %v2030
        %2143 = vst [vmem:[%s235 + $0x220] sm:$0xff] %v2031
        %2144 = vst [vmem:[%s235 + $0x228] sm:$0xff] %v2032
        %2145 = vst [vmem:[%s235 + $0x230] sm:$0xff] %v2033
        %2146 = vst [vmem:[%s235 + $0x238] sm:$0xff] %v2034
        %2147 = vst [vmem:[%s235 + $0x240] sm:$0xff] %v2035
        %2148 = vst [vmem:[%s235 + $0x248] sm:$0xff] %v2036
        %2149 = vst [vmem:[%s235 + $0x250] sm:$0xff] %v2037
        %2150 = vst [vmem:[%s235 + $0x258] sm:$0xff] %v2038
        %2151 = vst [vmem:[%s235 + $0x260] sm:$0xff] %v2039
        %2152 = vst [vmem:[%s235 + $0x268] sm:$0xff] %v2040
        %2153 = vst [vmem:[%s235 + $0x270] sm:$0xff] %v2041
        %2154 = vst [vmem:[%s235 + $0x278] sm:$0xff] %v2042
        %2155 = vst [vmem:[%s235 + $0x280] sm:$0xff] %v2043
        %2156 = vst [vmem:[%s235 + $0x288] sm:$0xff] %v2044
        %2157 = vst [vmem:[%s235 + $0x290] sm:$0xff] %v2045
        %2158 = vst [vmem:[%s235 + $0x298] sm:$0xff] %v2046
        %2159 = vst [vmem:[%s235 + $0x2a0] sm:$0xff] %v2047
        %2160 = vst [vmem:[%s235 + $0x2a8] sm:$0xff] %v2048
        %2161 = vst [vmem:[%s235 + $0x2b0] sm:$0xff] %v2049
        %2162 = vst [vmem:[%s235 + $0x2b8] sm:$0xff] %v2050
        %2163 = vst [vmem:[%s235 + $0x2c0] sm:$0xff] %v2051
        %2164 = vst [vmem:[%s235 + $0x2c8] sm:$0xff] %v2052
        %2165 = vst [vmem:[%s235 + $0x2d0] sm:$0xff] %v2053
        %2166 = vst [vmem:[%s235 + $0x2d8] sm:$0xff] %v2054
        %2167 = vst [vmem:[%s235 + $0x2e0] sm:$0xff] %v2055
        %2168 = vst [vmem:[%s235 + $0x2e8] sm:$0xff] %v2056
        %2169 = vst [vmem:[%s235 + $0x2f0] sm:$0xff] %v2057
        %2170 = vst [vmem:[%s235 + $0x2f8] sm:$0xff] %v2058
        %2171 = vst [vmem:[%s235 + $0x300] sm:$0xff] %v2059
        %2172 = vst [vmem:[%s235 + $0x308] sm:$0xff] %v2060
        %2173 = vst [vmem:[%s235 + $0x310] sm:$0xff] %v2061
        %2174 = vst [vmem:[%s235 + $0x318] sm:$0xff] %v2062
        %2175 = vst [vmem:[%s235 + $0x320] sm:$0xff] %v2063
        %2176 = vst [vmem:[%s235 + $0x328] sm:$0xff] %v2064
        %2177 = vst [vmem:[%s235 + $0x330] sm:$0xff] %v2065
        %2178 = vst [vmem:[%s235 + $0x338] sm:$0xff] %v2066
        %2179 = vst [vmem:[%s235 + $0x340] sm:$0xff] %v2067
        %2180 = vst [vmem:[%s235 + $0x348] sm:$0xff] %v2068
        %2181 = vst [vmem:[%s235 + $0x350] sm:$0xff] %v2069
        %2182 = vst [vmem:[%s235 + $0x358] sm:$0xff] %v2070
        %2183 = vst [vmem:[%s235 + $0x360] sm:$0xff] %v2071
        %2184 = vst [vmem:[%s235 + $0x368] sm:$0xff] %v2072
        %2185 = vst [vmem:[%s235 + $0x370] sm:$0xff] %v2073
        %2186 = vst [vmem:[%s235 + $0x378] sm:$0xff] %v2074
        %s2187 = sand.u32 %s138, 1
        %s2188 = scalar_lea.sflag [#allocation4], %s2187
        %s2189 = sand.u32 %s138, 1
        %s2190 = smul.addr %s2189, 896
        %s2191 = scalar_lea.vmem [#allocation5], %s2190
        // Predicated region
        $region45: #{tpu_custom_call.1} parent=39 // pred_check
          %p2192 = pneg %p148
        $region46: #{tpu_custom_call.1} parent=39 // pred_check_branch
          %2194 = sbr.rel (%p2192) target = $region48
        $region47: #{tpu_custom_call.1} parent=39 // pred_region
          %s2195 = smul.u32 16, %s20
          %2197 = vsyncadd %s2188, 0
          %s2198 = smul.addr %s2195, 7
          %s2199 = smul.addr %s2198, 8
          %s2200 = scalar_lea.hbm %s5, %s2199
          %s2201 = sshll.u32 %s2191, 4
          %s2202 = int_to_ptr.vmem [resolvable:$true] %s2201
          %s2203 = sshll.u32 %s2200, 4
          %s2204 = int_to_ptr.hbm [resolvable:$true] %s2203
          %2209 = dma.vmem_to_hbm [thread:$0]  %s2202, 14336, %s2204, %s2188, 896, 896, 56
        $region48: #{tpu_custom_call.1} parent=39 // pred_fallthru
          _
      $region40: #{tpu_custom_call.1} parent=5 // pred_fallthru
        _
      %p2210 = scmp.le.s32.totalorder 2, %s15
      // Predicated region
      $region49: #{tpu_custom_call.1} parent=5 // pred_check
        %p2211 = pneg %p2210
      $region50: #{tpu_custom_call.1} parent=5 // pred_check_branch
        %2213 = sbr.rel (%p2211) target = $region52
      $region51: #{tpu_custom_call.1} parent=5 // pred_region
        %s2214 = ssub.s32 %s15, 2
        // Predicated region
        $region53: #{tpu_custom_call.1} parent=51 // pred_check
          %p2215 = pneg %p154
        $region54: #{tpu_custom_call.1} parent=51 // pred_check_branch
          %2217 = sbr.rel (%p2215) target = $region56
        $region55: #{tpu_custom_call.1} parent=51 // pred_region
          %s2218 = sand.u32 %s139, 1
          %s2219 = scalar_lea.sflag [#allocation4], %s2218
          %s2220 = sand.u32 %s139, 1
          %s2221 = smul.addr %s2220, 896
          %s2222 = scalar_lea.vmem [#allocation5], %s2221
          %2224 = dma.done %s2219, 14336
        $region56: #{tpu_custom_call.1} parent=51 // pred_fallthru
          _
      $region52: #{tpu_custom_call.1} parent=5 // pred_fallthru
        _
    $region6: #{tpu_custom_call.1} parent=1 // loop_footer
      %s19 = sadd.s32 1, %s15
    $region7: #{tpu_custom_call.1} parent=1 // loop_footer_branch
      %14 = sbr.rel target = $region3
    $region8: #{tpu_custom_call.1} parent=1 // loop_exit
      _
    %2225 = vsyncpa [#allocation3], 1
    %s2226 = scalar_lea.sflag [#allocation3], 1
    %2227 = vsyncpa %s2226, 1
    %2228 = vsyncpa [#allocation4], 1
    %s2229 = scalar_lea.sflag [#allocation4], 1
    %2230 = vsyncpa %s2229, 1

</llo_original>
